<compile_context>
chip_gen: v7x
topology: tpu7x:2x2x1
jax: 0.10.0
libtpu: 0.0.40
codegen_flags: <defaults>
</compile_context>

<pallas_src>
import functools

import jax
import jax.numpy as jnp
from jax.experimental import pallas as pl
from jax.experimental.pallas import tpu as pltpu


def _elu(x):
    # Negative branch clamped so exp() never sees large positive inputs.
    return jnp.where(x > 0, x, jnp.exp(jnp.minimum(x, 0.0)) - 1.0)


# --------------------------- fused forward kernel ----------------------------
def _gatr_kernel(x_ref, adj_ref, w1_ref, b1_ref, w2_ref, b2_ref,
                 fc1w_ref, fc1b_ref, headw_ref, headb_ref,
                 dc2w_ref, dc2b_ref,
                 logits_ref, cls_ref, out_ref,
                 *, num_roi, heads1, c1, heads2, c2, dc_hidden):
    """Whole GATR forward for ONE graph; the grid iterates over graphs."""
    x = x_ref[...]                         # [num_roi, F]
    adj = adj_ref[0]                       # [num_roi, num_roi]; adj[i, j]=1 iff edge j->i
    # Additive -inf mask, computed once and shared by both GAT layers / all heads.
    mask_bias = jnp.where(adj > 0, jnp.float32(0.0), jnp.float32(-1e30))
    ones_col = jnp.ones((num_roi, 1), jnp.float32)

    def gat_heads(feat, w_aug_ref, heads, c):
        # One MXU matmul yields the stacked per-head projections AND both
        # attention scores (a_src / a_dst reductions folded in as extra columns).
        proj = jnp.dot(feat, w_aug_ref[...], preferred_element_type=jnp.float32)
        hfeat = proj[:, :heads * c]                        # [n, heads*c] lane-dense
        outs = []
        for h in range(heads):                             # heads unrolled statically
            ed = proj[:, heads * c + h: heads * c + h + 1]              # e_dst, [n, 1]
            es = proj[:, heads * c + heads + h: heads * c + heads + h + 1]
            # raw[i, j] = e_dst[i] + e_src[j]; the rank-1 matmul puts e_src along
            # lanes without a sublane->lane transpose.
            raw = jax.lax.dot_general(ones_col, es, (((1,), (1,)), ((), ())),
                                      preferred_element_type=jnp.float32) + ed
            logits = jnp.where(raw > 0, raw, 0.2 * raw) + mask_bias     # LeakyReLU(0.2)
            m = jnp.max(logits, axis=-1, keepdims=True)
            p = jnp.exp(logits - m)           # masked entries underflow to exactly 0
            inv = pl.reciprocal(jnp.sum(p, axis=-1, keepdims=True), approx=True)
            alpha = p * inv
            # TODO(synk): attention dropout (p=0.6) is training-only; identity in eval.
            outs.append(jnp.dot(alpha, hfeat[:, h * c:(h + 1) * c],
                                preferred_element_type=jnp.float32))
        return outs

    # conv1 (concat heads) + F.elu; input dropout p=0.6 is identity in eval.
    h1 = jnp.concatenate(gat_heads(x, w1_ref, heads1, c1), axis=1) + b1_ref[...]
    h1 = _elu(h1)                                          # [num_roi, heads1*c1]

    # conv2 (concat=False -> mean over heads), no activation afterwards.
    outs2 = gat_heads(h1, w2_ref, heads2, c2)
    h2 = outs2[0]
    for o in outs2[1:]:
        h2 = h2 + o
    h2 = h2 * (1.0 / heads2) + b2_ref[...]                 # [num_roi, c2]

    # x.reshape(-1, num_roi*c2) restricted to this graph -> lane-dense [1, F1].
    # (num_roi small lane-concats feeding a single MXU matmul.)
    flat = jnp.concatenate([h2[r:r + 1, :] for r in range(num_roi)], axis=1)

    # fc1 -> BatchNorm1d (eval stats folded into fc1 weights/bias) -> ELU.
    feat = _elu(jnp.dot(flat, fc1w_ref[...], preferred_element_type=jnp.float32)
                + fc1b_ref[...])                           # [1, num_roi]
    out_ref[0] = feat                                      # head dropout: identity (eval)

    # fc2 and the first domain-classifier layer fused into one matmul:
    # columns [0:dc_hidden] -> domain hidden, [dc_hidden:dc_hidden+2] -> logits.
    z = jnp.dot(feat, headw_ref[...], preferred_element_type=jnp.float32) + headb_ref[...]
    logits_ref[0] = z[:, dc_hidden:dc_hidden + 2]

    # grad_reverse is identity in the forward pass; domain classifier layer 2.
    d = jnp.maximum(z[:, :dc_hidden], 0.0)
    cls_ref[0] = jnp.dot(d, dc2w_ref[...],
                         preferred_element_type=jnp.float32) + dc2b_ref[...]


# --------------------------------- wrapper -----------------------------------
def gatr_forward(x, adj, params, *, numROI, hid, in_head, out_head, bn_eps=1e-5):
    """x: [batch*numROI, numROI] node features; adj: [batch, numROI, numROI]."""
    heads1, c1 = in_head, hid
    heads2, c2 = out_head, hid * in_head
    batch = adj.shape[0]
    dc_hidden = params["dc1_w"].shape[1]

    def stack_aug(w, a_src, a_dst):
        # [heads, fin, c] -> [fin, heads*c | heads (e_dst cols) | heads (e_src cols)]
        fin = w.shape[1]
        w_stacked = jnp.transpose(w, (1, 0, 2)).reshape(fin, -1)
        av_dst = jnp.einsum("hfc,hc->fh", w, a_dst)
        av_src = jnp.einsum("hfc,hc->fh", w, a_src)
        return jnp.concatenate([w_stacked, av_dst, av_src], axis=1)

    w1_aug = stack_aug(params["w1"], params["asrc1"], params["adst1"])
    w2_aug = stack_aug(params["w2"], params["asrc2"], params["adst2"])
    b1 = params["b1"].reshape(1, heads1 * c1)
    b2 = params["b2"].reshape(1, c2)

    # Fold eval-mode BatchNorm1d into fc1 (exact at inference).
    scale = params["bn_gamma"] * jax.lax.rsqrt(params["bn_rv"] + bn_eps)
    fc1_w = params["fc1_w"] * scale[None, :]
    fc1_b = ((params["fc1_b"] - params["bn_rm"]) * scale
             + params["bn_beta"]).reshape(1, numROI)

    # Fuse fc2 and domain-classifier layer 1 into a single [numROI, dc_hidden+2] matmul.
    head_w = jnp.concatenate([params["dc1_w"], params["fc2_w"]], axis=1)
    head_b = jnp.concatenate([params["dc1_b"], params["fc2_b"]]).reshape(1, -1)
    dc2_b = params["dc2_b"].reshape(1, -1)

    def rep(a):  # replicated (whole-array) block, same for every grid step
        nd = a.ndim
        return pl.BlockSpec(a.shape, lambda g: (0,) * nd)

    kernel = functools.partial(_gatr_kernel, num_roi=numROI, heads1=heads1,
                               c1=c1, heads2=heads2, c2=c2, dc_hidden=dc_hidden)

    logits3, cls3, out3 = pl.pallas_call(
        kernel,
        grid=(batch,),
        in_specs=[
            pl.BlockSpec((numROI, x.shape[1]), lambda g: (g, 0)),    # this graph's nodes
            pl.BlockSpec((1, numROI, numROI), lambda g: (g, 0, 0)),  # this graph's adjacency
            rep(w1_aug), rep(b1), rep(w2_aug), rep(b2),
            rep(fc1_w), rep(fc1_b), rep(head_w), rep(head_b),
            rep(params["dc2_w"]), rep(dc2_b),
        ],
        out_specs=(
            pl.BlockSpec((1, 1, 2), lambda g: (g, 0, 0)),
            pl.BlockSpec((1, 1, 6), lambda g: (g, 0, 0)),
            pl.BlockSpec((1, 1, numROI), lambda g: (g, 0, 0)),
        ),
        out_shape=(
            jax.ShapeDtypeStruct((batch, 1, 2), jnp.float32),
            jax.ShapeDtypeStruct((batch, 1, 6), jnp.float32),
            jax.ShapeDtypeStruct((batch, 1, numROI), jnp.float32),
        ),
        compiler_params=pltpu.CompilerParams(dimension_semantics=("parallel",)),
    )(x, adj, w1_aug, b1, w2_aug, b2, fc1_w, fc1_b, head_w, head_b,
      params["dc2_w"], dc2_b)

    return logits3[:, 0, :], cls3[:, 0, :], out3[:, 0, :]


# ------------------------------- parameters ----------------------------------
def init_params(key, numROI, hid, in_head, out_head):
    ks = jax.random.split(key, 10)
    s = 0.1
    p = {}
    C1 = hid
    p["w1"] = jax.random.normal(ks[0], (in_head, numROI, C1), jnp.float32) * s
    p["asrc1"] = jax.random.normal(ks[1], (in_head, C1), jnp.float32) * s
    p["adst1"] = jax.random.normal(ks[2], (in_head, C1), jnp.float32) * s
    p["b1"] = jnp.zeros((in_head * C1,), jnp.float32)
    C2 = hid * in_head
    p["w2"] = jax.random.normal(ks[3], (out_head, C2, C2), jnp.float32) * s
    p["asrc2"] = jax.random.normal(ks[4], (out_head, C2), jnp.float32) * s
    p["adst2"] = jax.random.normal(ks[5], (out_head, C2), jnp.float32) * s
    p["b2"] = jnp.zeros((C2,), jnp.float32)
    F1 = numROI * hid * in_head
    p["fc1_w"] = jax.random.normal(ks[6], (F1, numROI), jnp.float32) * s
    p["fc1_b"] = jnp.zeros((numROI,), jnp.float32)
    p["bn_gamma"] = jnp.ones((numROI,), jnp.float32)
    p["bn_beta"] = jnp.zeros((numROI,), jnp.float32)
    p["bn_rm"] = jnp.zeros((numROI,), jnp.float32)
    p["bn_rv"] = jnp.ones((numROI,), jnp.float32)
    p["fc2_w"] = jax.random.normal(ks[7], (numROI, 2), jnp.float32) * s
    p["fc2_b"] = jnp.zeros((2,), jnp.float32)
    p["dc1_w"] = jax.random.normal(ks[8], (numROI, 64), jnp.float32) * s
    p["dc1_b"] = jnp.zeros((64,), jnp.float32)
    p["dc2_w"] = jax.random.normal(ks[9], (64, 6), jnp.float32) * s
    p["dc2_b"] = jnp.zeros((6,), jnp.float32)
    return p


if __name__ == "__main__":
    numROI, hid, in_head, out_head = 16, 8, 2, 1
    batch = 2

    key = jax.random.PRNGKey(0)
    kx, kp = jax.random.split(key)
    x = jax.random.normal(kx, (batch * numROI, numROI), jnp.float32)

    # Per-graph ring adjacency (bidirectional) + self loops (GATConv add_self_loops).
    idx = jnp.arange(numROI)
    nxt = (idx + 1) % numROI
    ring = jnp.zeros((numROI, numROI), jnp.float32)
    ring = ring.at[nxt, idx].set(1.0)    # edge idx -> nxt   (adj[dst, src])
    ring = ring.at[idx, nxt].set(1.0)    # edge nxt -> idx
    ring = ring.at[idx, idx].set(1.0)    # self loops
    adj = jnp.broadcast_to(ring, (batch, numROI, numROI))

    params = init_params(kp, numROI, hid, in_head, out_head)

    fwd = jax.jit(functools.partial(gatr_forward, numROI=numROI, hid=hid,
                                    in_head=in_head, out_head=out_head))
    logits, cls_logits, out = fwd(x, adj, params)
    jax.block_until_ready((logits, cls_logits, out))

    assert logits.shape == (batch, 2)
    assert cls_logits.shape == (batch, 6)
    assert out.shape == (batch, numROI)   # `out` is the post-fc1/bn1/elu feature
    print("KERNEL_OK")
</pallas_src>

<mosaic_0001>
module attributes {stable_mosaic.version = 11 : i64} {
  func.func @_gatr_kernel(%arg0: i32, %arg1: memref<16x16xf32, #tpu.memory_space<vmem>>, %arg2: memref<1x16x16xf32, #tpu.memory_space<vmem>>, %arg3: memref<16x20xf32, #tpu.memory_space<vmem>>, %arg4: memref<1x16xf32, #tpu.memory_space<vmem>>, %arg5: memref<16x18xf32, #tpu.memory_space<vmem>>, %arg6: memref<1x16xf32, #tpu.memory_space<vmem>>, %arg7: memref<256x16xf32, #tpu.memory_space<vmem>>, %arg8: memref<1x16xf32, #tpu.memory_space<vmem>>, %arg9: memref<16x66xf32, #tpu.memory_space<vmem>>, %arg10: memref<1x66xf32, #tpu.memory_space<vmem>>, %arg11: memref<64x6xf32, #tpu.memory_space<vmem>>, %arg12: memref<1x6xf32, #tpu.memory_space<vmem>>, %arg13: memref<1x1x2xf32, #tpu.memory_space<vmem>>, %arg14: memref<1x1x6xf32, #tpu.memory_space<vmem>>, %arg15: memref<1x1x16xf32, #tpu.memory_space<vmem>>) attributes {dimension_semantics = [#tpu.dimension_semantics<parallel>], iteration_bounds = array<i64: 2>, scalar_prefetch = 0 : i64, scratch_operands = 0 : i64, tpu.core_type = #tpu.core_type<tc>, window_params = [{transform_indices = @transform_0, window_bounds = array<i64: 16, 16>}, {transform_indices = @transform_1, window_bounds = array<i64: 1, 16, 16>}, {pipeline_mode = #tpu.pipeline_mode<synchronous>, transform_indices = @transform_2, window_bounds = array<i64: 16, 20>}, {pipeline_mode = #tpu.pipeline_mode<synchronous>, transform_indices = @transform_3, window_bounds = array<i64: 1, 16>}, {pipeline_mode = #tpu.pipeline_mode<synchronous>, transform_indices = @transform_4, window_bounds = array<i64: 16, 18>}, {pipeline_mode = #tpu.pipeline_mode<synchronous>, transform_indices = @transform_5, window_bounds = array<i64: 1, 16>}, {pipeline_mode = #tpu.pipeline_mode<synchronous>, transform_indices = @transform_6, window_bounds = array<i64: 256, 16>}, {pipeline_mode = #tpu.pipeline_mode<synchronous>, transform_indices = @transform_7, window_bounds = array<i64: 1, 16>}, {pipeline_mode = #tpu.pipeline_mode<synchronous>, transform_indices = @transform_8, window_bounds = array<i64: 16, 66>}, {pipeline_mode = #tpu.pipeline_mode<synchronous>, transform_indices = @transform_9, window_bounds = array<i64: 1, 66>}, {pipeline_mode = #tpu.pipeline_mode<synchronous>, transform_indices = @transform_10, window_bounds = array<i64: 64, 6>}, {pipeline_mode = #tpu.pipeline_mode<synchronous>, transform_indices = @transform_11, window_bounds = array<i64: 1, 6>}, {transform_indices = @transform_12, window_bounds = array<i64: 1, 1, 2>}, {transform_indices = @transform_13, window_bounds = array<i64: 1, 1, 6>}, {transform_indices = @transform_14, window_bounds = array<i64: 1, 1, 16>}]} {
    %c0 = arith.constant 0 : index
    %c0_0 = arith.constant 0 : index
    %0 = vector.load %arg1[%c0, %c0_0] : memref<16x16xf32, #tpu.memory_space<vmem>>, vector<16x16xf32>
    %c0_1 = arith.constant 0 : index
    %c0_2 = arith.constant 0 : index
    %c0_3 = arith.constant 0 : index
    %1 = vector.load %arg2[%c0_1, %c0_2, %c0_3] : memref<1x16x16xf32, #tpu.memory_space<vmem>>, vector<1x16x16xf32>
    %2 = vector.shape_cast %1 : vector<1x16x16xf32> to vector<16x16xf32>
    %cst = arith.constant 0.000000e+00 : f32
    %3 = vector.broadcast %cst : f32 to vector<16x16xf32>
    %4 = arith.cmpf ogt, %2, %3 : vector<16x16xf32>
    %cst_4 = arith.constant 0.000000e+00 : f32
    %cst_5 = arith.constant -1.000000e+30 : f32
    %5 = vector.broadcast %cst_4 : f32 to vector<16x16xf32>
    %6 = vector.broadcast %cst_5 : f32 to vector<16x16xf32>
    %7 = arith.select %4, %5, %6 : vector<16x16xi1>, vector<16x16xf32>
    %cst_6 = arith.constant 1.000000e+00 : f32
    %8 = vector.broadcast %cst_6 : f32 to vector<16x1xf32>
    %c0_7 = arith.constant 0 : index
    %c0_8 = arith.constant 0 : index
    %9 = vector.load %arg3[%c0_7, %c0_8] : memref<16x20xf32, #tpu.memory_space<vmem>>, vector<16x20xf32>
    %cst_9 = arith.constant dense<0.000000e+00> : vector<16x20xf32>
    %10 = tpu.matmul %0, %9, %cst_9 {dimension_numbers = #tpu.dot_dimension_numbers<[1], [0], [0], [1], [0, 0, 1, 1], [], []>} : vector<16x16xf32>, vector<16x20xf32>, vector<16x20xf32> -> vector<16x20xf32>
    %11 = vector.extract_strided_slice %10 {offsets = [0, 0], sizes = [16, 16], strides = [1, 1]} : vector<16x20xf32> to vector<16x16xf32>
    %12 = vector.extract_strided_slice %10 {offsets = [0, 16], sizes = [16, 1], strides = [1, 1]} : vector<16x20xf32> to vector<16x1xf32>
    %13 = vector.extract_strided_slice %10 {offsets = [0, 18], sizes = [16, 1], strides = [1, 1]} : vector<16x20xf32> to vector<16x1xf32>
    %cst_10 = arith.constant dense<0.000000e+00> : vector<16x16xf32>
    %14 = tpu.matmul %8, %13, %cst_10 {dimension_numbers = #tpu.dot_dimension_numbers<[1], [1], [0], [0], [0, 0, 1, 0], [], []>} : vector<16x1xf32>, vector<16x1xf32>, vector<16x16xf32> -> vector<16x16xf32>
    %15 = vector.broadcast %12 : vector<16x1xf32> to vector<16x16xf32>
    %16 = arith.addf %14, %15 : vector<16x16xf32>
    %cst_11 = arith.constant 0.000000e+00 : f32
    %17 = vector.broadcast %cst_11 : f32 to vector<16x16xf32>
    %18 = arith.cmpf ogt, %16, %17 : vector<16x16xf32>
    %cst_12 = arith.constant 2.000000e-01 : f32
    %19 = vector.broadcast %cst_12 : f32 to vector<16x16xf32>
    %20 = arith.mulf %19, %16 : vector<16x16xf32>
    %21 = arith.select %18, %16, %20 : vector<16x16xi1>, vector<16x16xf32>
    %22 = arith.addf %21, %7 : vector<16x16xf32>
    %cst_13 = arith.constant dense<0xFF800000> : vector<16xf32>
    %23 = vector.multi_reduction <maximumf>, %22, %cst_13 [1] : vector<16x16xf32> to vector<16xf32>
    %24 = vector.shape_cast %23 : vector<16xf32> to vector<16x1xf32>
    %25 = vector.broadcast %24 : vector<16x1xf32> to vector<16x16xf32>
    %26 = arith.subf %22, %25 : vector<16x16xf32>
    %27 = math.exp %26 : vector<16x16xf32>
    %cst_14 = arith.constant dense<0.000000e+00> : vector<16xf32>
    %28 = vector.multi_reduction <add>, %27, %cst_14 [1] : vector<16x16xf32> to vector<16xf32>
    %29 = vector.shape_cast %28 : vector<16xf32> to vector<16x1xf32>
    %30 = tpu.reciprocal %29 {approx = true} : vector<16x1xf32> -> vector<16x1xf32>
    %31 = vector.broadcast %30 : vector<16x1xf32> to vector<16x16xf32>
    %32 = arith.mulf %27, %31 : vector<16x16xf32>
    %33 = vector.extract_strided_slice %11 {offsets = [0, 0], sizes = [16, 8], strides = [1, 1]} : vector<16x16xf32> to vector<16x8xf32>
    %cst_15 = arith.constant dense<0.000000e+00> : vector<16x8xf32>
    %34 = tpu.matmul %32, %33, %cst_15 {dimension_numbers = #tpu.dot_dimension_numbers<[1], [0], [0], [1], [0, 0, 1, 1], [], []>} : vector<16x16xf32>, vector<16x8xf32>, vector<16x8xf32> -> vector<16x8xf32>
    %35 = vector.extract_strided_slice %10 {offsets = [0, 17], sizes = [16, 1], strides = [1, 1]} : vector<16x20xf32> to vector<16x1xf32>
    %36 = vector.extract_strided_slice %10 {offsets = [0, 19], sizes = [16, 1], strides = [1, 1]} : vector<16x20xf32> to vector<16x1xf32>
    %cst_16 = arith.constant dense<0.000000e+00> : vector<16x16xf32>
    %37 = tpu.matmul %8, %36, %cst_16 {dimension_numbers = #tpu.dot_dimension_numbers<[1], [1], [0], [0], [0, 0, 1, 0], [], []>} : vector<16x1xf32>, vector<16x1xf32>, vector<16x16xf32> -> vector<16x16xf32>
    %38 = vector.broadcast %35 : vector<16x1xf32> to vector<16x16xf32>
    %39 = arith.addf %37, %38 : vector<16x16xf32>
    %cst_17 = arith.constant 0.000000e+00 : f32
    %40 = vector.broadcast %cst_17 : f32 to vector<16x16xf32>
    %41 = arith.cmpf ogt, %39, %40 : vector<16x16xf32>
    %cst_18 = arith.constant 2.000000e-01 : f32
    %42 = vector.broadcast %cst_18 : f32 to vector<16x16xf32>
    %43 = arith.mulf %42, %39 : vector<16x16xf32>
    %44 = arith.select %41, %39, %43 : vector<16x16xi1>, vector<16x16xf32>
    %45 = arith.addf %44, %7 : vector<16x16xf32>
    %cst_19 = arith.constant dense<0xFF800000> : vector<16xf32>
    %46 = vector.multi_reduction <maximumf>, %45, %cst_19 [1] : vector<16x16xf32> to vector<16xf32>
    %47 = vector.shape_cast %46 : vector<16xf32> to vector<16x1xf32>
    %48 = vector.broadcast %47 : vector<16x1xf32> to vector<16x16xf32>
    %49 = arith.subf %45, %48 : vector<16x16xf32>
    %50 = math.exp %49 : vector<16x16xf32>
    %cst_20 = arith.constant dense<0.000000e+00> : vector<16xf32>
    %51 = vector.multi_reduction <add>, %50, %cst_20 [1] : vector<16x16xf32> to vector<16xf32>
    %52 = vector.shape_cast %51 : vector<16xf32> to vector<16x1xf32>
    %53 = tpu.reciprocal %52 {approx = true} : vector<16x1xf32> -> vector<16x1xf32>
    %54 = vector.broadcast %53 : vector<16x1xf32> to vector<16x16xf32>
    %55 = arith.mulf %50, %54 : vector<16x16xf32>
    %56 = vector.extract_strided_slice %11 {offsets = [0, 8], sizes = [16, 8], strides = [1, 1]} : vector<16x16xf32> to vector<16x8xf32>
    %cst_21 = arith.constant dense<0.000000e+00> : vector<16x8xf32>
    %57 = tpu.matmul %55, %56, %cst_21 {dimension_numbers = #tpu.dot_dimension_numbers<[1], [0], [0], [1], [0, 0, 1, 1], [], []>} : vector<16x16xf32>, vector<16x8xf32>, vector<16x8xf32> -> vector<16x8xf32>
    %58 = tpu.concatenate %34, %57 in 1 : vector<16x8xf32>, vector<16x8xf32> -> vector<16x16xf32>
    %c0_22 = arith.constant 0 : index
    %c0_23 = arith.constant 0 : index
    %59 = vector.load %arg4[%c0_22, %c0_23] : memref<1x16xf32, #tpu.memory_space<vmem>>, vector<1x16xf32>
    %60 = vector.broadcast %59 : vector<1x16xf32> to vector<16x16xf32>
    %61 = arith.addf %58, %60 : vector<16x16xf32>
    %cst_24 = arith.constant 0.000000e+00 : f32
    %62 = vector.broadcast %cst_24 : f32 to vector<16x16xf32>
    %63 = arith.cmpf ogt, %61, %62 : vector<16x16xf32>
    %cst_25 = arith.constant 0.000000e+00 : f32
    %64 = vector.broadcast %cst_25 : f32 to vector<16x16xf32>
    %65 = arith.minimumf %61, %64 : vector<16x16xf32>
    %66 = math.exp %65 : vector<16x16xf32>
    %cst_26 = arith.constant 1.000000e+00 : f32
    %67 = vector.broadcast %cst_26 : f32 to vector<16x16xf32>
    %68 = arith.subf %66, %67 : vector<16x16xf32>
    %69 = arith.select %63, %61, %68 : vector<16x16xi1>, vector<16x16xf32>
    %c0_27 = arith.constant 0 : index
    %c0_28 = arith.constant 0 : index
    %70 = vector.load %arg5[%c0_27, %c0_28] : memref<16x18xf32, #tpu.memory_space<vmem>>, vector<16x18xf32>
    %cst_29 = arith.constant dense<0.000000e+00> : vector<16x18xf32>
    %71 = tpu.matmul %69, %70, %cst_29 {dimension_numbers = #tpu.dot_dimension_numbers<[1], [0], [0], [1], [0, 0, 1, 1], [], []>} : vector<16x16xf32>, vector<16x18xf32>, vector<16x18xf32> -> vector<16x18xf32>
    %72 = vector.extract_strided_slice %71 {offsets = [0, 0], sizes = [16, 16], strides = [1, 1]} : vector<16x18xf32> to vector<16x16xf32>
    %73 = vector.extract_strided_slice %71 {offsets = [0, 16], sizes = [16, 1], strides = [1, 1]} : vector<16x18xf32> to vector<16x1xf32>
    %74 = vector.extract_strided_slice %71 {offsets = [0, 17], sizes = [16, 1], strides = [1, 1]} : vector<16x18xf32> to vector<16x1xf32>
    %cst_30 = arith.constant dense<0.000000e+00> : vector<16x16xf32>
    %75 = tpu.matmul %8, %74, %cst_30 {dimension_numbers = #tpu.dot_dimension_numbers<[1], [1], [0], [0], [0, 0, 1, 0], [], []>} : vector<16x1xf32>, vector<16x1xf32>, vector<16x16xf32> -> vector<16x16xf32>
    %76 = vector.broadcast %73 : vector<16x1xf32> to vector<16x16xf32>
    %77 = arith.addf %75, %76 : vector<16x16xf32>
    %cst_31 = arith.constant 0.000000e+00 : f32
    %78 = vector.broadcast %cst_31 : f32 to vector<16x16xf32>
    %79 = arith.cmpf ogt, %77, %78 : vector<16x16xf32>
    %cst_32 = arith.constant 2.000000e-01 : f32
    %80 = vector.broadcast %cst_32 : f32 to vector<16x16xf32>
    %81 = arith.mulf %80, %77 : vector<16x16xf32>
    %82 = arith.select %79, %77, %81 : vector<16x16xi1>, vector<16x16xf32>
    %83 = arith.addf %82, %7 : vector<16x16xf32>
    %cst_33 = arith.constant dense<0xFF800000> : vector<16xf32>
    %84 = vector.multi_reduction <maximumf>, %83, %cst_33 [1] : vector<16x16xf32> to vector<16xf32>
    %85 = vector.shape_cast %84 : vector<16xf32> to vector<16x1xf32>
    %86 = vector.broadcast %85 : vector<16x1xf32> to vector<16x16xf32>
    %87 = arith.subf %83, %86 : vector<16x16xf32>
    %88 = math.exp %87 : vector<16x16xf32>
    %cst_34 = arith.constant dense<0.000000e+00> : vector<16xf32>
    %89 = vector.multi_reduction <add>, %88, %cst_34 [1] : vector<16x16xf32> to vector<16xf32>
    %90 = vector.shape_cast %89 : vector<16xf32> to vector<16x1xf32>
    %91 = tpu.reciprocal %90 {approx = true} : vector<16x1xf32> -> vector<16x1xf32>
    %92 = vector.broadcast %91 : vector<16x1xf32> to vector<16x16xf32>
    %93 = arith.mulf %88, %92 : vector<16x16xf32>
    %cst_35 = arith.constant dense<0.000000e+00> : vector<16x16xf32>
    %94 = tpu.matmul %93, %72, %cst_35 {dimension_numbers = #tpu.dot_dimension_numbers<[1], [0], [0], [1], [0, 0, 1, 1], [], []>} : vector<16x16xf32>, vector<16x16xf32>, vector<16x16xf32> -> vector<16x16xf32>
    %cst_36 = arith.constant 1.000000e+00 : f32
    %95 = vector.broadcast %cst_36 : f32 to vector<16x16xf32>
    %96 = arith.mulf %94, %95 : vector<16x16xf32>
    %c0_37 = arith.constant 0 : index
    %c0_38 = arith.constant 0 : index
    %97 = vector.load %arg6[%c0_37, %c0_38] : memref<1x16xf32, #tpu.memory_space<vmem>>, vector<1x16xf32>
    %98 = vector.broadcast %97 : vector<1x16xf32> to vector<16x16xf32>
    %99 = arith.addf %96, %98 : vector<16x16xf32>
    %100 = vector.extract_strided_slice %99 {offsets = [0, 0], sizes = [1, 16], strides = [1, 1]} : vector<16x16xf32> to vector<1x16xf32>
    %101 = vector.extract_strided_slice %99 {offsets = [1, 0], sizes = [1, 16], strides = [1, 1]} : vector<16x16xf32> to vector<1x16xf32>
    %102 = vector.extract_strided_slice %99 {offsets = [2, 0], sizes = [1, 16], strides = [1, 1]} : vector<16x16xf32> to vector<1x16xf32>
    %103 = vector.extract_strided_slice %99 {offsets = [3, 0], sizes = [1, 16], strides = [1, 1]} : vector<16x16xf32> to vector<1x16xf32>
    %104 = vector.extract_strided_slice %99 {offsets = [4, 0], sizes = [1, 16], strides = [1, 1]} : vector<16x16xf32> to vector<1x16xf32>
    %105 = vector.extract_strided_slice %99 {offsets = [5, 0], sizes = [1, 16], strides = [1, 1]} : vector<16x16xf32> to vector<1x16xf32>
    %106 = vector.extract_strided_slice %99 {offsets = [6, 0], sizes = [1, 16], strides = [1, 1]} : vector<16x16xf32> to vector<1x16xf32>
    %107 = vector.extract_strided_slice %99 {offsets = [7, 0], sizes = [1, 16], strides = [1, 1]} : vector<16x16xf32> to vector<1x16xf32>
    %108 = vector.extract_strided_slice %99 {offsets = [8, 0], sizes = [1, 16], strides = [1, 1]} : vector<16x16xf32> to vector<1x16xf32>
    %109 = vector.extract_strided_slice %99 {offsets = [9, 0], sizes = [1, 16], strides = [1, 1]} : vector<16x16xf32> to vector<1x16xf32>
    %110 = vector.extract_strided_slice %99 {offsets = [10, 0], sizes = [1, 16], strides = [1, 1]} : vector<16x16xf32> to vector<1x16xf32>
    %111 = vector.extract_strided_slice %99 {offsets = [11, 0], sizes = [1, 16], strides = [1, 1]} : vector<16x16xf32> to vector<1x16xf32>
    %112 = vector.extract_strided_slice %99 {offsets = [12, 0], sizes = [1, 16], strides = [1, 1]} : vector<16x16xf32> to vector<1x16xf32>
    %113 = vector.extract_strided_slice %99 {offsets = [13, 0], sizes = [1, 16], strides = [1, 1]} : vector<16x16xf32> to vector<1x16xf32>
    %114 = vector.extract_strided_slice %99 {offsets = [14, 0], sizes = [1, 16], strides = [1, 1]} : vector<16x16xf32> to vector<1x16xf32>
    %115 = vector.extract_strided_slice %99 {offsets = [15, 0], sizes = [1, 16], strides = [1, 1]} : vector<16x16xf32> to vector<1x16xf32>
    %116 = tpu.concatenate %100, %101, %102, %103, %104, %105, %106, %107, %108, %109, %110, %111, %112, %113, %114, %115 in 1 : vector<1x16xf32>, vector<1x16xf32>, vector<1x16xf32>, vector<1x16xf32>, vector<1x16xf32>, vector<1x16xf32>, vector<1x16xf32>, vector<1x16xf32>, vector<1x16xf32>, vector<1x16xf32>, vector<1x16xf32>, vector<1x16xf32>, vector<1x16xf32>, vector<1x16xf32>, vector<1x16xf32>, vector<1x16xf32> -> vector<1x256xf32>
    %c0_39 = arith.constant 0 : index
    %c0_40 = arith.constant 0 : index
    %117 = vector.load %arg7[%c0_39, %c0_40] : memref<256x16xf32, #tpu.memory_space<vmem>>, vector<256x16xf32>
    %cst_41 = arith.constant dense<0.000000e+00> : vector<1x16xf32>
    %118 = tpu.matmul %116, %117, %cst_41 {dimension_numbers = #tpu.dot_dimension_numbers<[1], [0], [0], [1], [0, 0, 1, 1], [], []>} : vector<1x256xf32>, vector<256x16xf32>, vector<1x16xf32> -> vector<1x16xf32>
    %c0_42 = arith.constant 0 : index
    %c0_43 = arith.constant 0 : index
    %119 = vector.load %arg8[%c0_42, %c0_43] : memref<1x16xf32, #tpu.memory_space<vmem>>, vector<1x16xf32>
    %120 = arith.addf %118, %119 : vector<1x16xf32>
    %cst_44 = arith.constant 0.000000e+00 : f32
    %121 = vector.broadcast %cst_44 : f32 to vector<1x16xf32>
    %122 = arith.cmpf ogt, %120, %121 : vector<1x16xf32>
    %cst_45 = arith.constant 0.000000e+00 : f32
    %123 = vector.broadcast %cst_45 : f32 to vector<1x16xf32>
    %124 = arith.minimumf %120, %123 : vector<1x16xf32>
    %125 = math.exp %124 : vector<1x16xf32>
    %cst_46 = arith.constant 1.000000e+00 : f32
    %126 = vector.broadcast %cst_46 : f32 to vector<1x16xf32>
    %127 = arith.subf %125, %126 : vector<1x16xf32>
    %128 = arith.select %122, %120, %127 : vector<1x16xi1>, vector<1x16xf32>
    %c0_47 = arith.constant 0 : index
    %c0_48 = arith.constant 0 : index
    %c0_49 = arith.constant 0 : index
    %129 = vector.load %arg15[%c0_47, %c0_48, %c0_49] : memref<1x1x16xf32, #tpu.memory_space<vmem>>, vector<1x1x16xf32>
    %130 = vector.shape_cast %129 : vector<1x1x16xf32> to vector<1x16xf32>
    %131 = vector.shape_cast %128 : vector<1x16xf32> to vector<1x1x16xf32>
    tpu.vector_store %arg15[%c0_47, %c0_48, %c0_49], %131 {strides = array<i32>} : memref<1x1x16xf32, #tpu.memory_space<vmem>>, vector<1x1x16xf32>,
    %c0_50 = arith.constant 0 : index
    %c0_51 = arith.constant 0 : index
    %132 = vector.load %arg9[%c0_50, %c0_51] : memref<16x66xf32, #tpu.memory_space<vmem>>, vector<16x66xf32>
    %cst_52 = arith.constant dense<0.000000e+00> : vector<1x66xf32>
    %133 = tpu.matmul %128, %132, %cst_52 {dimension_numbers = #tpu.dot_dimension_numbers<[1], [0], [0], [1], [0, 0, 1, 1], [], []>} : vector<1x16xf32>, vector<16x66xf32>, vector<1x66xf32> -> vector<1x66xf32>
    %c0_53 = arith.constant 0 : index
    %c0_54 = arith.constant 0 : index
    %134 = vector.load %arg10[%c0_53, %c0_54] : memref<1x66xf32, #tpu.memory_space<vmem>>, vector<1x66xf32>
    %135 = arith.addf %133, %134 : vector<1x66xf32>
    %136 = vector.extract_strided_slice %135 {offsets = [0, 64], sizes = [1, 2], strides = [1, 1]} : vector<1x66xf32> to vector<1x2xf32>
    %c0_55 = arith.constant 0 : index
    %c0_56 = arith.constant 0 : index
    %c0_57 = arith.constant 0 : index
    %137 = vector.load %arg13[%c0_55, %c0_56, %c0_57] : memref<1x1x2xf32, #tpu.memory_space<vmem>>, vector<1x1x2xf32>
    %138 = vector.shape_cast %137 : vector<1x1x2xf32> to vector<1x2xf32>
    %139 = vector.shape_cast %136 : vector<1x2xf32> to vector<1x1x2xf32>
    tpu.vector_store %arg13[%c0_55, %c0_56, %c0_57], %139 {strides = array<i32>} : memref<1x1x2xf32, #tpu.memory_space<vmem>>, vector<1x1x2xf32>,
    %140 = vector.extract_strided_slice %135 {offsets = [0, 0], sizes = [1, 64], strides = [1, 1]} : vector<1x66xf32> to vector<1x64xf32>
    %cst_58 = arith.constant 0.000000e+00 : f32
    %141 = vector.broadcast %cst_58 : f32 to vector<1x64xf32>
    %142 = arith.maximumf %140, %141 : vector<1x64xf32>
    %c0_59 = arith.constant 0 : index
    %c0_60 = arith.constant 0 : index
    %143 = vector.load %arg11[%c0_59, %c0_60] : memref<64x6xf32, #tpu.memory_space<vmem>>, vector<64x6xf32>
    %cst_61 = arith.constant dense<0.000000e+00> : vector<1x6xf32>
    %144 = tpu.matmul %142, %143, %cst_61 {dimension_numbers = #tpu.dot_dimension_numbers<[1], [0], [0], [1], [0, 0, 1, 1], [], []>} : vector<1x64xf32>, vector<64x6xf32>, vector<1x6xf32> -> vector<1x6xf32>
    %c0_62 = arith.constant 0 : index
    %c0_63 = arith.constant 0 : index
    %145 = vector.load %arg12[%c0_62, %c0_63] : memref<1x6xf32, #tpu.memory_space<vmem>>, vector<1x6xf32>
    %146 = arith.addf %144, %145 : vector<1x6xf32>
    %c0_64 = arith.constant 0 : index
    %c0_65 = arith.constant 0 : index
    %c0_66 = arith.constant 0 : index
    %147 = vector.load %arg14[%c0_64, %c0_65, %c0_66] : memref<1x1x6xf32, #tpu.memory_space<vmem>>, vector<1x1x6xf32>
    %148 = vector.shape_cast %147 : vector<1x1x6xf32> to vector<1x6xf32>
    %149 = vector.shape_cast %146 : vector<1x6xf32> to vector<1x1x6xf32>
    tpu.vector_store %arg14[%c0_64, %c0_65, %c0_66], %149 {strides = array<i32>} : memref<1x1x6xf32, #tpu.memory_space<vmem>>, vector<1x1x6xf32>,
    return
  }
  func.func @transform_0(%arg0: i32) -> (i32, i32) {
    %c0_i32 = arith.constant 0 : i32
    %c0_i32_0 = arith.constant 0 : i32
    return %arg0, %c0_i32 : i32, i32
  }
  func.func @transform_1(%arg0: i32) -> (i32, i32, i32) {
    %c0_i32 = arith.constant 0 : i32
    %c0_i32_0 = arith.constant 0 : i32
    %c0_i32_1 = arith.constant 0 : i32
    return %arg0, %c0_i32, %c0_i32_0 : i32, i32, i32
  }
  func.func @transform_2(%arg0: i32) -> (i32, i32) {
    %c0_i32 = arith.constant 0 : i32
    %c0_i32_0 = arith.constant 0 : i32
    %c0_i32_1 = arith.constant 0 : i32
    return %c0_i32, %c0_i32_0 : i32, i32
  }
  func.func @transform_3(%arg0: i32) -> (i32, i32) {
    %c0_i32 = arith.constant 0 : i32
    %c0_i32_0 = arith.constant 0 : i32
    %c0_i32_1 = arith.constant 0 : i32
    return %c0_i32, %c0_i32_0 : i32, i32
  }
  func.func @transform_4(%arg0: i32) -> (i32, i32) {
    %c0_i32 = arith.constant 0 : i32
    %c0_i32_0 = arith.constant 0 : i32
    %c0_i32_1 = arith.constant 0 : i32
    return %c0_i32, %c0_i32_0 : i32, i32
  }
  func.func @transform_5(%arg0: i32) -> (i32, i32) {
    %c0_i32 = arith.constant 0 : i32
    %c0_i32_0 = arith.constant 0 : i32
    %c0_i32_1 = arith.constant 0 : i32
    return %c0_i32, %c0_i32_0 : i32, i32
  }
  func.func @transform_6(%arg0: i32) -> (i32, i32) {
    %c0_i32 = arith.constant 0 : i32
    %c0_i32_0 = arith.constant 0 : i32
    %c0_i32_1 = arith.constant 0 : i32
    return %c0_i32, %c0_i32_0 : i32, i32
  }
  func.func @transform_7(%arg0: i32) -> (i32, i32) {
    %c0_i32 = arith.constant 0 : i32
    %c0_i32_0 = arith.constant 0 : i32
    %c0_i32_1 = arith.constant 0 : i32
    return %c0_i32, %c0_i32_0 : i32, i32
  }
  func.func @transform_8(%arg0: i32) -> (i32, i32) {
    %c0_i32 = arith.constant 0 : i32
    %c0_i32_0 = arith.constant 0 : i32
    %c0_i32_1 = arith.constant 0 : i32
    return %c0_i32, %c0_i32_0 : i32, i32
  }
  func.func @transform_9(%arg0: i32) -> (i32, i32) {
    %c0_i32 = arith.constant 0 : i32
    %c0_i32_0 = arith.constant 0 : i32
    %c0_i32_1 = arith.constant 0 : i32
    return %c0_i32, %c0_i32_0 : i32, i32
  }
  func.func @transform_10(%arg0: i32) -> (i32, i32) {
    %c0_i32 = arith.constant 0 : i32
    %c0_i32_0 = arith.constant 0 : i32
    %c0_i32_1 = arith.constant 0 : i32
    return %c0_i32, %c0_i32_0 : i32, i32
  }
  func.func @transform_11(%arg0: i32) -> (i32, i32) {
    %c0_i32 = arith.constant 0 : i32
    %c0_i32_0 = arith.constant 0 : i32
    %c0_i32_1 = arith.constant 0 : i32
    return %c0_i32, %c0_i32_0 : i32, i32
  }
  func.func @transform_12(%arg0: i32) -> (i32, i32, i32) {
    %c0_i32 = arith.constant 0 : i32
    %c0_i32_0 = arith.constant 0 : i32
    %c0_i32_1 = arith.constant 0 : i32
    return %arg0, %c0_i32, %c0_i32_0 : i32, i32, i32
  }
  func.func @transform_13(%arg0: i32) -> (i32, i32, i32) {
    %c0_i32 = arith.constant 0 : i32
    %c0_i32_0 = arith.constant 0 : i32
    %c0_i32_1 = arith.constant 0 : i32
    return %arg0, %c0_i32, %c0_i32_0 : i32, i32, i32
  }
  func.func @transform_14(%arg0: i32) -> (i32, i32, i32) {
    %c0_i32 = arith.constant 0 : i32
    %c0_i32_0 = arith.constant 0 : i32
    %c0_i32_1 = arith.constant 0 : i32
    return %arg0, %c0_i32, %c0_i32_0 : i32, i32, i32
  }
}

</mosaic_0001>

<llo_original>
// kernel: gatr_forward.1
$region0: #{gatr_forward.1}
  #allocation0 [shape = 'u32[]', space=smem, size = 0x4, offset = 0x4, fixed_abs, tag = 'smem constant byte address 0x4 - core index']
  #allocation1 [shape = 'u32[144,128]{1,0:T(1,128)}', space=vmem, size = 0x12000, scoped, tag = 'internal scratch']
  %s0 = inlined_call_operand.vmem [shape: f32[32,16], index: 0, kind: input, shape index: {}]
  %s1 = inlined_call_operand.vmem [shape: f32[2,16,16], index: 1, kind: input, shape index: {}]
  %s2 = inlined_call_operand.vmem [shape: f32[16,20], index: 2, kind: input, shape index: {}]
  %s3 = inlined_call_operand.vmem [shape: f32[1,16], index: 3, kind: input, shape index: {}]
  %s4 = inlined_call_operand.vmem [shape: f32[16,18], index: 4, kind: input, shape index: {}]
  %s5 = inlined_call_operand.vmem [shape: f32[1,16], index: 5, kind: input, shape index: {}]
  %s6 = inlined_call_operand.vmem [shape: f32[256,16], index: 6, kind: input, shape index: {}]
  %s7 = inlined_call_operand.vmem [shape: f32[1,16], index: 7, kind: input, shape index: {}]
  %s8 = inlined_call_operand.vmem [shape: f32[16,66], index: 8, kind: input, shape index: {}]
  %s9 = inlined_call_operand.vmem [shape: f32[1,66], index: 9, kind: input, shape index: {}]
  %s10 = inlined_call_operand.vmem [shape: f32[64,6], index: 10, kind: input, shape index: {}]
  %s11 = inlined_call_operand.vmem [shape: f32[1,6], index: 11, kind: input, shape index: {}]
  %s12 = inlined_call_operand.hbm [shape: f32[2,1,2], index: 12, kind: output, shape index: {0}]
  %s13 = inlined_call_operand.hbm [shape: f32[2,1,6], index: 13, kind: output, shape index: {1}]
  %s14 = inlined_call_operand.hbm [shape: f32[2,1,16], index: 14, kind: output, shape index: {2}]
  %15 = xla_tuple %s12, %s13, %s14
  %s16 = sld [smem:[#allocation0]]
  $region97: #{gatr_forward.1} parent=0
    _
  %s18 = ssub.s32 1, %s16
  %s19 = scalar_select 0, %s18, %s16
  $region1: #{gatr_forward.1} parent=0
    #allocation2 [shape = 'u8[1024]{0}', space=vmem, size = 0x400, scoped, tag = 'output window, operand 0']
    #allocation3 [shape = 's32[2]{0}', space=sflag, size = 0x8, scoped, tag = 'scoped memory for gatr_forward.1']
    #allocation4 [shape = 'u8[1024]{0}', space=vmem, size = 0x400, scoped, tag = 'output window, operand 1']
    #allocation5 [shape = 's32[2]{0}', space=sflag, size = 0x8, scoped, tag = 'scoped memory for gatr_forward.1']
    #allocation6 [shape = 'u8[1024]{0}', space=vmem, size = 0x400, scoped, tag = 'output window, operand 2']
    %20 = vsyncpa [#allocation3], 0
    %s21 = scalar_lea.sflag [#allocation3], 1
    %22 = vsyncpa %s21, 0
    %23 = vsyncpa [#allocation5], 0
    %s24 = scalar_lea.sflag [#allocation5], 1
    %25 = vsyncpa %s24, 0
    loop: start=0, step=1, limit=4
    $region2: #{gatr_forward.1} parent=1 // loop_pre_header
      _
    $region3: #{gatr_forward.1} parent=1 // loop_header
      %s27 = sphi 0, %s31
      %p28 = scmp.ge.s32.totalorder %s27, 4
      %s37 = sphi 0, %s39
      %s40 = sphi 0, %s37
      %s41 = sphi 0, %s40
      %s57 = sphi 0, %s41
      %s63 = sphi 0, %s65
      %s66 = sphi 0, %s63
      %s67 = sphi 0, %s66
      %s83 = sphi 0, %s67
      %s87 = sphi 0, %s87
      %s89 = sphi 0, %s87
      %s90 = sphi 0, %s89
      %s104 = sphi 0, %s90
      %s108 = sphi 0, %s108
      %s110 = sphi 0, %s108
      %s111 = sphi 0, %s110
      %s125 = sphi 0, %s111
      %s129 = sphi 0, %s129
      %s131 = sphi 0, %s129
      %s132 = sphi 0, %s131
      %s146 = sphi 0, %s132
      %s150 = sphi 0, %s150
      %s152 = sphi 0, %s150
      %s153 = sphi 0, %s152
      %s167 = sphi 0, %s153
      %s171 = sphi 0, %s171
      %s173 = sphi 0, %s171
      %s174 = sphi 0, %s173
      %s188 = sphi 0, %s174
      %s192 = sphi 0, %s192
      %s194 = sphi 0, %s192
      %s195 = sphi 0, %s194
      %s209 = sphi 0, %s195
      %s213 = sphi 0, %s213
      %s215 = sphi 0, %s213
      %s216 = sphi 0, %s215
      %s230 = sphi 0, %s216
      %s234 = sphi 0, %s234
      %s236 = sphi 0, %s234
      %s237 = sphi 0, %s236
      %s251 = sphi 0, %s237
      %s255 = sphi 0, %s255
      %s257 = sphi 0, %s255
      %s258 = sphi 0, %s257
      %s272 = sphi 0, %s258
      %s276 = sphi 0, %s276
      %s278 = sphi 0, %s276
      %s279 = sphi 0, %s278
      %s293 = sphi 0, %s279
      %s299 = sphi 0, %s301
      %s302 = sphi 0, %s299
      %s303 = sphi 0, %s302
      %s319 = sphi 0, %s303
      %s325 = sphi 0, %s327
      %s328 = sphi 0, %s325
      %s329 = sphi 0, %s328
      %s345 = sphi 0, %s329
      %s351 = sphi 0, %s353
      %s354 = sphi 0, %s351
      %s355 = sphi 0, %s354
      %s371 = sphi 0, %s355
    $region4: #{gatr_forward.1} parent=1 // loop_header_branch
      %30 = sbr.rel (%p28) target = $region8
    $region5: #{gatr_forward.1} parent=1 // loop_body
      %s32 = ssub.s32 %s27, 1
      %s33 = ssub.s32 %s27, 2
      %s34 = sadd.s32 %s27, 1
      %s35 = ssub.s32 %s27, %s34
      %p36 = scmp.eq.s32.totalorder %s35, 0
      %s38 = sadd.s32 %s37, 1
      %s39 = scalar_select %p36, %s37, %s38
      %p42 = pneg %p36
      %p43 = scmp.eq.s32.totalorder %s27, 1
      %p44 = por %p42, %p43
      %p45 = scmp.ne.s32.totalorder %s37, %s40
      %p46 = scmp.eq.s32.totalorder %s27, 0
      %p47 = por %p45, %p46
      %p48 = scmp.ne.s32.totalorder %s37, %s40
      %p49 = scmp.eq.s32.totalorder %s32, 1
      %p50 = por %p48, %p49
      %p51 = scmp.ne.s32.totalorder %s40, %s41
      %p52 = scmp.eq.s32.totalorder %s32, 0
      %p53 = por %p51, %p52
      %p54 = scmp.ne.s32.totalorder %s40, %s41
      %p55 = scmp.eq.s32.totalorder %s33, 1
      %p56 = por %p54, %p55
      %p58 = scmp.ne.s32.totalorder %s41, %s57
      %p59 = scmp.eq.s32.totalorder %s33, 0
      %p60 = por %p58, %p59
      %s61 = ssub.s32 %s27, %s34
      %p62 = scmp.eq.s32.totalorder %s61, 0
      %s64 = sadd.s32 %s63, 1
      %s65 = scalar_select %p62, %s63, %s64
      %p68 = pneg %p62
      %p69 = scmp.eq.s32.totalorder %s27, 1
      %p70 = por %p68, %p69
      %p71 = scmp.ne.s32.totalorder %s63, %s66
      %p72 = scmp.eq.s32.totalorder %s27, 0
      %p73 = por %p71, %p72
      %p74 = scmp.ne.s32.totalorder %s63, %s66
      %p75 = scmp.eq.s32.totalorder %s32, 1
      %p76 = por %p74, %p75
      %p77 = scmp.ne.s32.totalorder %s66, %s67
      %p78 = scmp.eq.s32.totalorder %s32, 0
      %p79 = por %p77, %p78
      %p80 = scmp.ne.s32.totalorder %s66, %s67
      %p81 = scmp.eq.s32.totalorder %s33, 1
      %p82 = por %p80, %p81
      %p84 = scmp.ne.s32.totalorder %s67, %s83
      %p85 = scmp.eq.s32.totalorder %s33, 0
      %p86 = por %p84, %p85
      %s88 = sadd.s32 %s87, 1
      %p91 = scmp.eq.s32.totalorder %s27, 1
      %p92 = scmp.ne.s32.totalorder %s87, %s89
      %p93 = scmp.eq.s32.totalorder %s27, 0
      %p94 = por %p92, %p93
      %p95 = scmp.ne.s32.totalorder %s87, %s89
      %p96 = scmp.eq.s32.totalorder %s32, 1
      %p97 = por %p95, %p96
      %p98 = scmp.ne.s32.totalorder %s89, %s90
      %p99 = scmp.eq.s32.totalorder %s32, 0
      %p100 = por %p98, %p99
      %p101 = scmp.ne.s32.totalorder %s89, %s90
      %p102 = scmp.eq.s32.totalorder %s33, 1
      %p103 = por %p101, %p102
      %p105 = scmp.ne.s32.totalorder %s90, %s104
      %p106 = scmp.eq.s32.totalorder %s33, 0
      %p107 = por %p105, %p106
      %s109 = sadd.s32 %s108, 1
      %p112 = scmp.eq.s32.totalorder %s27, 1
      %p113 = scmp.ne.s32.totalorder %s108, %s110
      %p114 = scmp.eq.s32.totalorder %s27, 0
      %p115 = por %p113, %p114
      %p116 = scmp.ne.s32.totalorder %s108, %s110
      %p117 = scmp.eq.s32.totalorder %s32, 1
      %p118 = por %p116, %p117
      %p119 = scmp.ne.s32.totalorder %s110, %s111
      %p120 = scmp.eq.s32.totalorder %s32, 0
      %p121 = por %p119, %p120
      %p122 = scmp.ne.s32.totalorder %s110, %s111
      %p123 = scmp.eq.s32.totalorder %s33, 1
      %p124 = por %p122, %p123
      %p126 = scmp.ne.s32.totalorder %s111, %s125
      %p127 = scmp.eq.s32.totalorder %s33, 0
      %p128 = por %p126, %p127
      %s130 = sadd.s32 %s129, 1
      %p133 = scmp.eq.s32.totalorder %s27, 1
      %p134 = scmp.ne.s32.totalorder %s129, %s131
      %p135 = scmp.eq.s32.totalorder %s27, 0
      %p136 = por %p134, %p135
      %p137 = scmp.ne.s32.totalorder %s129, %s131
      %p138 = scmp.eq.s32.totalorder %s32, 1
      %p139 = por %p137, %p138
      %p140 = scmp.ne.s32.totalorder %s131, %s132
      %p141 = scmp.eq.s32.totalorder %s32, 0
      %p142 = por %p140, %p141
      %p143 = scmp.ne.s32.totalorder %s131, %s132
      %p144 = scmp.eq.s32.totalorder %s33, 1
      %p145 = por %p143, %p144
      %p147 = scmp.ne.s32.totalorder %s132, %s146
      %p148 = scmp.eq.s32.totalorder %s33, 0
      %p149 = por %p147, %p148
      %s151 = sadd.s32 %s150, 1
      %p154 = scmp.eq.s32.totalorder %s27, 1
      %p155 = scmp.ne.s32.totalorder %s150, %s152
      %p156 = scmp.eq.s32.totalorder %s27, 0
      %p157 = por %p155, %p156
      %p158 = scmp.ne.s32.totalorder %s150, %s152
      %p159 = scmp.eq.s32.totalorder %s32, 1
      %p160 = por %p158, %p159
      %p161 = scmp.ne.s32.totalorder %s152, %s153
      %p162 = scmp.eq.s32.totalorder %s32, 0
      %p163 = por %p161, %p162
      %p164 = scmp.ne.s32.totalorder %s152, %s153
      %p165 = scmp.eq.s32.totalorder %s33, 1
      %p166 = por %p164, %p165
      %p168 = scmp.ne.s32.totalorder %s153, %s167
      %p169 = scmp.eq.s32.totalorder %s33, 0
      %p170 = por %p168, %p169
      %s172 = sadd.s32 %s171, 1
      %p175 = scmp.eq.s32.totalorder %s27, 1
      %p176 = scmp.ne.s32.totalorder %s171, %s173
      %p177 = scmp.eq.s32.totalorder %s27, 0
      %p178 = por %p176, %p177
      %p179 = scmp.ne.s32.totalorder %s171, %s173
      %p180 = scmp.eq.s32.totalorder %s32, 1
      %p181 = por %p179, %p180
      %p182 = scmp.ne.s32.totalorder %s173, %s174
      %p183 = scmp.eq.s32.totalorder %s32, 0
      %p184 = por %p182, %p183
      %p185 = scmp.ne.s32.totalorder %s173, %s174
      %p186 = scmp.eq.s32.totalorder %s33, 1
      %p187 = por %p185, %p186
      %p189 = scmp.ne.s32.totalorder %s174, %s188
      %p190 = scmp.eq.s32.totalorder %s33, 0
      %p191 = por %p189, %p190
      %s193 = sadd.s32 %s192, 1
      %p196 = scmp.eq.s32.totalorder %s27, 1
      %p197 = scmp.ne.s32.totalorder %s192, %s194
      %p198 = scmp.eq.s32.totalorder %s27, 0
      %p199 = por %p197, %p198
      %p200 = scmp.ne.s32.totalorder %s192, %s194
      %p201 = scmp.eq.s32.totalorder %s32, 1
      %p202 = por %p200, %p201
      %p203 = scmp.ne.s32.totalorder %s194, %s195
      %p204 = scmp.eq.s32.totalorder %s32, 0
      %p205 = por %p203, %p204
      %p206 = scmp.ne.s32.totalorder %s194, %s195
      %p207 = scmp.eq.s32.totalorder %s33, 1
      %p208 = por %p206, %p207
      %p210 = scmp.ne.s32.totalorder %s195, %s209
      %p211 = scmp.eq.s32.totalorder %s33, 0
      %p212 = por %p210, %p211
      %s214 = sadd.s32 %s213, 1
      %p217 = scmp.eq.s32.totalorder %s27, 1
      %p218 = scmp.ne.s32.totalorder %s213, %s215
      %p219 = scmp.eq.s32.totalorder %s27, 0
      %p220 = por %p218, %p219
      %p221 = scmp.ne.s32.totalorder %s213, %s215
      %p222 = scmp.eq.s32.totalorder %s32, 1
      %p223 = por %p221, %p222
      %p224 = scmp.ne.s32.totalorder %s215, %s216
      %p225 = scmp.eq.s32.totalorder %s32, 0
      %p226 = por %p224, %p225
      %p227 = scmp.ne.s32.totalorder %s215, %s216
      %p228 = scmp.eq.s32.totalorder %s33, 1
      %p229 = por %p227, %p228
      %p231 = scmp.ne.s32.totalorder %s216, %s230
      %p232 = scmp.eq.s32.totalorder %s33, 0
      %p233 = por %p231, %p232
      %s235 = sadd.s32 %s234, 1
      %p238 = scmp.eq.s32.totalorder %s27, 1
      %p239 = scmp.ne.s32.totalorder %s234, %s236
      %p240 = scmp.eq.s32.totalorder %s27, 0
      %p241 = por %p239, %p240
      %p242 = scmp.ne.s32.totalorder %s234, %s236
      %p243 = scmp.eq.s32.totalorder %s32, 1
      %p244 = por %p242, %p243
      %p245 = scmp.ne.s32.totalorder %s236, %s237
      %p246 = scmp.eq.s32.totalorder %s32, 0
      %p247 = por %p245, %p246
      %p248 = scmp.ne.s32.totalorder %s236, %s237
      %p249 = scmp.eq.s32.totalorder %s33, 1
      %p250 = por %p248, %p249
      %p252 = scmp.ne.s32.totalorder %s237, %s251
      %p253 = scmp.eq.s32.totalorder %s33, 0
      %p254 = por %p252, %p253
      %s256 = sadd.s32 %s255, 1
      %p259 = scmp.eq.s32.totalorder %s27, 1
      %p260 = scmp.ne.s32.totalorder %s255, %s257
      %p261 = scmp.eq.s32.totalorder %s27, 0
      %p262 = por %p260, %p261
      %p263 = scmp.ne.s32.totalorder %s255, %s257
      %p264 = scmp.eq.s32.totalorder %s32, 1
      %p265 = por %p263, %p264
      %p266 = scmp.ne.s32.totalorder %s257, %s258
      %p267 = scmp.eq.s32.totalorder %s32, 0
      %p268 = por %p266, %p267
      %p269 = scmp.ne.s32.totalorder %s257, %s258
      %p270 = scmp.eq.s32.totalorder %s33, 1
      %p271 = por %p269, %p270
      %p273 = scmp.ne.s32.totalorder %s258, %s272
      %p274 = scmp.eq.s32.totalorder %s33, 0
      %p275 = por %p273, %p274
      %s277 = sadd.s32 %s276, 1
      %p280 = scmp.eq.s32.totalorder %s27, 1
      %p281 = scmp.ne.s32.totalorder %s276, %s278
      %p282 = scmp.eq.s32.totalorder %s27, 0
      %p283 = por %p281, %p282
      %p284 = scmp.ne.s32.totalorder %s276, %s278
      %p285 = scmp.eq.s32.totalorder %s32, 1
      %p286 = por %p284, %p285
      %p287 = scmp.ne.s32.totalorder %s278, %s279
      %p288 = scmp.eq.s32.totalorder %s32, 0
      %p289 = por %p287, %p288
      %p290 = scmp.ne.s32.totalorder %s278, %s279
      %p291 = scmp.eq.s32.totalorder %s33, 1
      %p292 = por %p290, %p291
      %p294 = scmp.ne.s32.totalorder %s279, %s293
      %p295 = scmp.eq.s32.totalorder %s33, 0
      %p296 = por %p294, %p295
      %s297 = ssub.s32 %s27, %s34
      %p298 = scmp.eq.s32.totalorder %s297, 0
      %s300 = sadd.s32 %s299, 1
      %s301 = scalar_select %p298, %s299, %s300
      %p304 = pneg %p298
      %p305 = scmp.eq.s32.totalorder %s27, 1
      %p306 = por %p304, %p305
      %p307 = scmp.ne.s32.totalorder %s299, %s302
      %p308 = scmp.eq.s32.totalorder %s27, 0
      %p309 = por %p307, %p308
      %p310 = scmp.ne.s32.totalorder %s299, %s302
      %p311 = scmp.eq.s32.totalorder %s32, 1
      %p312 = por %p310, %p311
      %p313 = scmp.ne.s32.totalorder %s302, %s303
      %p314 = scmp.eq.s32.totalorder %s32, 0
      %p315 = por %p313, %p314
      %p316 = scmp.ne.s32.totalorder %s302, %s303
      %p317 = scmp.eq.s32.totalorder %s33, 1
      %p318 = por %p316, %p317
      %p320 = scmp.ne.s32.totalorder %s303, %s319
      %p321 = scmp.eq.s32.totalorder %s33, 0
      %p322 = por %p320, %p321
      %s323 = ssub.s32 %s27, %s34
      %p324 = scmp.eq.s32.totalorder %s323, 0
      %s326 = sadd.s32 %s325, 1
      %s327 = scalar_select %p324, %s325, %s326
      %p330 = pneg %p324
      %p331 = scmp.eq.s32.totalorder %s27, 1
      %p332 = por %p330, %p331
      %p333 = scmp.ne.s32.totalorder %s325, %s328
      %p334 = scmp.eq.s32.totalorder %s27, 0
      %p335 = por %p333, %p334
      %p336 = scmp.ne.s32.totalorder %s325, %s328
      %p337 = scmp.eq.s32.totalorder %s32, 1
      %p338 = por %p336, %p337
      %p339 = scmp.ne.s32.totalorder %s328, %s329
      %p340 = scmp.eq.s32.totalorder %s32, 0
      %p341 = por %p339, %p340
      %p342 = scmp.ne.s32.totalorder %s328, %s329
      %p343 = scmp.eq.s32.totalorder %s33, 1
      %p344 = por %p342, %p343
      %p346 = scmp.ne.s32.totalorder %s329, %s345
      %p347 = scmp.eq.s32.totalorder %s33, 0
      %p348 = por %p346, %p347
      %s349 = ssub.s32 %s27, %s34
      %p350 = scmp.eq.s32.totalorder %s349, 0
      %s352 = sadd.s32 %s351, 1
      %s353 = scalar_select %p350, %s351, %s352
      %p356 = pneg %p350
      %p357 = scmp.eq.s32.totalorder %s27, 1
      %p358 = por %p356, %p357
      %p359 = scmp.ne.s32.totalorder %s351, %s354
      %p360 = scmp.eq.s32.totalorder %s27, 0
      %p361 = por %p359, %p360
      %p362 = scmp.ne.s32.totalorder %s351, %s354
      %p363 = scmp.eq.s32.totalorder %s32, 1
      %p364 = por %p362, %p363
      %p365 = scmp.ne.s32.totalorder %s354, %s355
      %p366 = scmp.eq.s32.totalorder %s32, 0
      %p367 = por %p365, %p366
      %p368 = scmp.ne.s32.totalorder %s354, %s355
      %p369 = scmp.eq.s32.totalorder %s33, 1
      %p370 = por %p368, %p369
      %p372 = scmp.ne.s32.totalorder %s355, %s371
      %p373 = scmp.eq.s32.totalorder %s33, 0
      %p374 = por %p372, %p373
      %p375 = scmp.le.s32.totalorder 1, %s27
      %p376 = scmp.lt.s32.totalorder %s27, 3
      %p377 = pnand %p375, %p376
      %p378 = pneg %p377
      // Predicated region
      $region9: #{gatr_forward.1} parent=5 // pred_check
        _
      $region10: #{gatr_forward.1} parent=5 // pred_check_branch
        %380 = sbr.rel (%p377) target = $region12
      $region11: #{gatr_forward.1} parent=5 // pred_region
        %s381 = ssub.s32 %s27, 1
        // Predicated region
        $region13: #{gatr_forward.1} parent=11 // pred_check
          %p382 = pneg %p100
        $region14: #{gatr_forward.1} parent=11 // pred_check_branch
          %384 = sbr.rel (%p382) target = $region16
        $region15: #{gatr_forward.1} parent=11 // pred_region
          _
        $region16: #{gatr_forward.1} parent=11 // pred_fallthru
          _
        // Predicated region
        $region17: #{gatr_forward.1} parent=11 // pred_check
          %p385 = pneg %p121
        $region18: #{gatr_forward.1} parent=11 // pred_check_branch
          %387 = sbr.rel (%p385) target = $region20
        $region19: #{gatr_forward.1} parent=11 // pred_region
          _
        $region20: #{gatr_forward.1} parent=11 // pred_fallthru
          _
        // Predicated region
        $region21: #{gatr_forward.1} parent=11 // pred_check
          %p388 = pneg %p142
        $region22: #{gatr_forward.1} parent=11 // pred_check_branch
          %390 = sbr.rel (%p388) target = $region24
        $region23: #{gatr_forward.1} parent=11 // pred_region
          _
        $region24: #{gatr_forward.1} parent=11 // pred_fallthru
          _
        // Predicated region
        $region25: #{gatr_forward.1} parent=11 // pred_check
          %p391 = pneg %p163
        $region26: #{gatr_forward.1} parent=11 // pred_check_branch
          %393 = sbr.rel (%p391) target = $region28
        $region27: #{gatr_forward.1} parent=11 // pred_region
          _
        $region28: #{gatr_forward.1} parent=11 // pred_fallthru
          _
        // Predicated region
        $region29: #{gatr_forward.1} parent=11 // pred_check
          %p394 = pneg %p184
        $region30: #{gatr_forward.1} parent=11 // pred_check_branch
          %396 = sbr.rel (%p394) target = $region32
        $region31: #{gatr_forward.1} parent=11 // pred_region
          _
        $region32: #{gatr_forward.1} parent=11 // pred_fallthru
          _
        // Predicated region
        $region33: #{gatr_forward.1} parent=11 // pred_check
          %p397 = pneg %p205
        $region34: #{gatr_forward.1} parent=11 // pred_check_branch
          %399 = sbr.rel (%p397) target = $region36
        $region35: #{gatr_forward.1} parent=11 // pred_region
          _
        $region36: #{gatr_forward.1} parent=11 // pred_fallthru
          _
        // Predicated region
        $region37: #{gatr_forward.1} parent=11 // pred_check
          %p400 = pneg %p226
        $region38: #{gatr_forward.1} parent=11 // pred_check_branch
          %402 = sbr.rel (%p400) target = $region40
        $region39: #{gatr_forward.1} parent=11 // pred_region
          _
        $region40: #{gatr_forward.1} parent=11 // pred_fallthru
          _
        // Predicated region
        $region41: #{gatr_forward.1} parent=11 // pred_check
          %p403 = pneg %p247
        $region42: #{gatr_forward.1} parent=11 // pred_check_branch
          %405 = sbr.rel (%p403) target = $region44
        $region43: #{gatr_forward.1} parent=11 // pred_region
          _
        $region44: #{gatr_forward.1} parent=11 // pred_fallthru
          _
        // Predicated region
        $region45: #{gatr_forward.1} parent=11 // pred_check
          %p406 = pneg %p268
        $region46: #{gatr_forward.1} parent=11 // pred_check_branch
          %408 = sbr.rel (%p406) target = $region48
        $region47: #{gatr_forward.1} parent=11 // pred_region
          _
        $region48: #{gatr_forward.1} parent=11 // pred_fallthru
          _
        // Predicated region
        $region49: #{gatr_forward.1} parent=11 // pred_check
          %p409 = pneg %p289
        $region50: #{gatr_forward.1} parent=11 // pred_check_branch
          %411 = sbr.rel (%p409) target = $region52
        $region51: #{gatr_forward.1} parent=11 // pred_region
          _
        $region52: #{gatr_forward.1} parent=11 // pred_fallthru
          _
      $region12: #{gatr_forward.1} parent=5 // pred_fallthru
        _
      %p412 = scmp.lt.s32.totalorder %s27, 2
      // Predicated region
      $region53: #{gatr_forward.1} parent=5 // pred_check
        %p413 = pneg %p412
      $region54: #{gatr_forward.1} parent=5 // pred_check_branch
        %415 = sbr.rel (%p413) target = $region56
      $region55: #{gatr_forward.1} parent=5 // pred_region
        // Predicated region
        $region57: #{gatr_forward.1} parent=55 // pred_check
          %p416 = pneg %p47
        $region58: #{gatr_forward.1} parent=55 // pred_check_branch
          %418 = sbr.rel (%p416) target = $region60
        $region59: #{gatr_forward.1} parent=55 // pred_region
          %s419 = smul.u32 2, %s27
          %p420 = scmp.lt.s32.totalorder %s419, 3
          %s421 = scalar_select %p420, %s419, 3
          %s422 = smul.addr %s421, 8
          %s423 = scalar_lea.vmem %s0, %s422
          %s424 = smul.u32 2, %s27
        $region60: #{gatr_forward.1} parent=55 // pred_fallthru
          _
        // Predicated region
        $region61: #{gatr_forward.1} parent=55 // pred_check
          %p425 = pneg %p73
        $region62: #{gatr_forward.1} parent=55 // pred_check_branch
          %427 = sbr.rel (%p425) target = $region64
        $region63: #{gatr_forward.1} parent=55 // pred_region
          %p428 = scmp.lt.s32.totalorder %s27, 1
          %s429 = scalar_select %p428, %s27, 1
          %s430 = smul.addr %s429, 2
          %s431 = smul.addr %s430, 8
          %s432 = scalar_lea.vmem %s1, %s431
        $region64: #{gatr_forward.1} parent=55 // pred_fallthru
          _
      $region56: #{gatr_forward.1} parent=5 // pred_fallthru
        _
      %p433 = scmp.le.s32.totalorder 1, %s27
      %p434 = scmp.lt.s32.totalorder %s27, 3
      %p435 = pnand %p433, %p434
      %p436 = pneg %p435
      // Predicated region
      $region65: #{gatr_forward.1} parent=5 // pred_check
        _
      $region66: #{gatr_forward.1} parent=5 // pred_check_branch
        %438 = sbr.rel (%p435) target = $region68
      $region67: #{gatr_forward.1} parent=5 // pred_region
        %s439 = ssub.s32 %s27, 1
        %s440 = smul.u32 2, %s32
        %p441 = scmp.lt.s32.totalorder %s440, 3
        %s442 = scalar_select %p441, %s440, 3
        %s443 = smul.addr %s442, 8
        %s444 = scalar_lea.vmem %s0, %s443
        %p445 = pneg %p53
        %p446 = pneg %p50
        %p447 = scmp.lt.s32.totalorder %s32, 1
        %s448 = scalar_select %p447, %s32, 1
        %s449 = smul.addr %s448, 2
        %s450 = smul.addr %s449, 8
        %s451 = scalar_lea.vmem %s1, %s450
        %p452 = pneg %p79
        %p453 = pneg %p76
        %p454 = pneg %p100
        %p455 = pneg %p97
        %p456 = pneg %p121
        %p457 = pneg %p118
        %p458 = pneg %p142
        %p459 = pneg %p139
        %p460 = pneg %p163
        %p461 = pneg %p160
        %p462 = pneg %p184
        %p463 = pneg %p181
        %p464 = pneg %p205
        %p465 = pneg %p202
        %p466 = pneg %p226
        %p467 = pneg %p223
        %p468 = pneg %p247
        %p469 = pneg %p244
        %p470 = pneg %p268
        %p471 = pneg %p265
        %p472 = pneg %p289
        %p473 = pneg %p286
        %p474 = pneg %p315
        %p475 = pneg %p312
        %s476 = sand.u32 %s302, 1
        %s477 = scalar_lea.sflag [#allocation3], %s476
        %s478 = sand.u32 %s302, 1
        %s479 = scalar_lea.vmem [#allocation2], %s478
        %p480 = pneg %p341
        %p481 = pneg %p338
        %s482 = sand.u32 %s32, 1
        %s483 = scalar_lea.sflag [#allocation5], %s482
        %s484 = sand.u32 %s328, 1
        %s485 = scalar_lea.vmem [#allocation4], %s484
        %p486 = pneg %p367
        %p487 = pneg %p364
        %s488 = sand.u32 %s32, 1
        %s489 = scalar_lea.sflag [#allocation5], %s488
        %s490 = sand.u32 %s354, 1
        %s491 = scalar_lea.vmem [#allocation6], %s490
        %s492 = smul.u32 2, %s32
        %p493 = scmp.lt.s32.totalorder %s492, 3
        %s494 = scalar_select %p493, %s492, 3
        %s495 = smul.addr %s494, 8
        %s496 = scalar_lea.vmem %s0, %s495
        %s497 = smul.u32 2, %s32
        %p498 = scmp.lt.s32.totalorder %s32, 1
        %s499 = scalar_select %p498, %s32, 1
        %s500 = smul.addr %s499, 2
        %s501 = smul.addr %s500, 8
        %s502 = scalar_lea.vmem %s1, %s501
        %v503 = vld [vmem:[%s496] sm:$0xff]
        %v504 = vld [vmem:[%s496 + $0x8] sm:$0xff]
        %v505 = vld [vmem:[%s502] sm:$0xff]
        %v506 = vld [vmem:[%s502 + $0x8] sm:$0xff]
        %vm507 = vcmp.gt.f32.partialorder %v505, 0.0
        %vm508 = vcmp.gt.f32.partialorder %v506, 0.0
        %v509 = vsel %vm507, 0.0, -1e+30
        %v510 = vsel %vm508, 0.0, -1e+30
        %v511 = vld [vmem:[%s2] sm:$0xff]
        %v512 = vld [vmem:[%s2 + $0x8] sm:$0xff]
        %vm513 = vcmask 130048
        %v515 = vsel %vm513, %v503, 0
        %v518 = vsel %vm513, %v504, 0
        %520 = vmatprep.subr.mxu0 0.0
        %521 = vmatpush1.msra.mxu0 %v511
        %522 = vmatprep.subr.mxu0 0.0
        %523 = vmatpush1.msra.mxu0 %v512
        %524 = vmatprep.subr.mxu0 0.0
        %525 = vmatpush1.msra.mxu0 0.0
        %526 = vmatprep.subr.mxu0 0.0
        %527 = vmatpush1.msra.mxu0 0.0
        %528 = vmatprep.subr.mxu0 0.0
        %529 = vmatpush1.msra.mxu0 0.0
        %530 = vmatprep.subr.mxu0 0.0
        %531 = vmatpush1.msra.mxu0 0.0
        %532 = vmatprep.subr.mxu0 0.0
        %533 = vmatpush1.msra.mxu0 0.0
        %534 = vmatprep.subr.mxu0 0.0
        %535 = vmatpush1.msra.mxu0 0.0
        %536 = vmatprep.subr.mxu0 0.0
        %537 = vmatpush1.msra.mxu0 0.0
        %538 = vmatprep.subr.mxu0 0.0
        %539 = vmatpush1.msra.mxu0 0.0
        %540 = vmatprep.subr.mxu0 0.0
        %541 = vmatpush1.msra.mxu0 0.0
        %542 = vmatprep.subr.mxu0 0.0
        %543 = vmatpush1.msra.mxu0 0.0
        %544 = vmatprep.subr.mxu0 0.0
        %545 = vmatpush1.msra.mxu0 0.0
        %546 = vmatprep.subr.mxu0 0.0
        %547 = vmatpush1.msra.mxu0 0.0
        %548 = vmatprep.subr.mxu0 0.0
        %549 = vmatpush1.msra.mxu0 0.0
        %550 = vmatprep.subr.mxu0 0.0
        %551 = vmatpush1.msra.mxu0 0.0
        %552 = vmatprep.subr.mxu0 0.0
        %553 = vmatpush1.msra.mxu0 0.0
        %554 = vmatprep.subr.mxu0 0.0
        %555 = vmatpush1.msra.mxu0 0.0
        %556 = vmatprep.subr.mxu0 0.0
        %557 = vmatpush1.msra.mxu0 0.0
        %558 = vmatprep.subr.mxu0 0.0
        %559 = vmatpush1.msra.mxu0 0.0
        %560 = vmatprep.subr.mxu0 0.0
        %561 = vmatpush1.msra.mxu0 0.0
        %562 = vmatprep.subr.mxu0 0.0
        %563 = vmatpush1.msra.mxu0 0.0
        %564 = vmatprep.subr.mxu0 0.0
        %565 = vmatpush1.msra.mxu0 0.0
        %566 = vmatprep.subr.mxu0 0.0
        %567 = vmatpush1.msra.mxu0 0.0
        %568 = vmatprep.subr.mxu0 0.0
        %569 = vmatpush1.msra.mxu0 0.0
        %570 = vmatprep.subr.mxu0 0.0
        %571 = vmatpush1.msra.mxu0 0.0
        %572 = vmatprep.subr.mxu0 0.0
        %573 = vmatpush1.msra.mxu0 0.0
        %574 = vmatprep.subr.mxu0 0.0
        %575 = vmatpush1.msra.mxu0 0.0
        %576 = vmatprep.subr.mxu0 0.0
        %577 = vmatpush1.msra.mxu0 0.0
        %578 = vmatprep.subr.mxu0 0.0
        %579 = vmatpush1.msra.mxu0 0.0
        %580 = vmatprep.subr.mxu0 0.0
        %581 = vmatpush1.msra.mxu0 0.0
        %582 = vmatprep.subr.mxu0 0.0
        %583 = vmatpush1.msra.mxu0 0.0
        %584 = vmatprep.mubr.f32.mxu0 0.0
        %585 = vmatmul.mubr.f32.gmra.mrb[0].mxu0 %v515
        %v586 = vpop.f32.mrb[0].mxu0
        %v587 = vadd.f32 0.0, %v586
        %v588 = vpop.f32.mrb[0].mxu0
        %589 = vmatprep.mubr.f32.mxu0 0.0
        %590 = vmatmul.mubr.f32.gmra.mrb[0].mxu0 %v518
        %v591 = vpop.f32.mrb[0].mxu0
        %v592 = vadd.f32 0.0, %v591
        %v593 = vpop.f32.mrb[0].mxu0
        %594 = vdwg.mxu0
        %596 = vset.pattern.permute.xlu0 16
        %597 = vperm.xlu0 %596, %v587
        %v598 = vpop.permute.xlu0 %597
        %601 = vset.pattern.permute.xlu0 16
        %602 = vperm.xlu0 %601, %v592
        %v603 = vpop.permute.xlu0 %602
        %605 = vrot.lane.b32.xlu0 %v587, 110
        %v606 = vpop.permute.xlu0 %605
        %607 = vrot.lane.b32.xlu0 %v592, 110
        %v608 = vpop.permute.xlu0 %607
        %vm609 = vcmask 7168
        %v611 = vsel %vm609, 1.0, 0
        %v613 = vsel %vm609, %v606, 0
        %v615 = vsel %vm609, %v608, 0
        %617 = vmatprep.subr.mxu0 0.0
        %618 = vmatpush1.xpose.msra.mxu0 %v613
        %619 = vmatprep.subr.mxu0 0.0
        %620 = vmatpush1.xpose.msra.mxu0 %v615
        %621 = vmatprep.subr.mxu0 0.0
        %622 = vmatpush1.xpose.msra.mxu0 0.0
        %623 = vmatprep.subr.mxu0 0.0
        %624 = vmatpush1.xpose.msra.mxu0 0.0
        %625 = vmatprep.subr.mxu0 0.0
        %626 = vmatpush1.xpose.msra.mxu0 0.0
        %627 = vmatprep.subr.mxu0 0.0
        %628 = vmatpush1.xpose.msra.mxu0 0.0
        %629 = vmatprep.subr.mxu0 0.0
        %630 = vmatpush1.xpose.msra.mxu0 0.0
        %631 = vmatprep.subr.mxu0 0.0
        %632 = vmatpush1.xpose.msra.mxu0 0.0
        %633 = vmatprep.subr.mxu0 0.0
        %634 = vmatpush1.xpose.msra.mxu0 0.0
        %635 = vmatprep.subr.mxu0 0.0
        %636 = vmatpush1.xpose.msra.mxu0 0.0
        %637 = vmatprep.subr.mxu0 0.0
        %638 = vmatpush1.xpose.msra.mxu0 0.0
        %639 = vmatprep.subr.mxu0 0.0
        %640 = vmatpush1.xpose.msra.mxu0 0.0
        %641 = vmatprep.subr.mxu0 0.0
        %642 = vmatpush1.xpose.msra.mxu0 0.0
        %643 = vmatprep.subr.mxu0 0.0
        %644 = vmatpush1.xpose.msra.mxu0 0.0
        %645 = vmatprep.subr.mxu0 0.0
        %646 = vmatpush1.xpose.msra.mxu0 0.0
        %647 = vmatprep.subr.mxu0 0.0
        %648 = vmatpush1.xpose.msra.mxu0 0.0
        %649 = vmatprep.subr.mxu0 0.0
        %650 = vmatpush1.xpose.msra.mxu0 0.0
        %651 = vmatprep.subr.mxu0 0.0
        %652 = vmatpush1.xpose.msra.mxu0 0.0
        %653 = vmatprep.subr.mxu0 0.0
        %654 = vmatpush1.xpose.msra.mxu0 0.0
        %655 = vmatprep.subr.mxu0 0.0
        %656 = vmatpush1.xpose.msra.mxu0 0.0
        %657 = vmatprep.subr.mxu0 0.0
        %658 = vmatpush1.xpose.msra.mxu0 0.0
        %659 = vmatprep.subr.mxu0 0.0
        %660 = vmatpush1.xpose.msra.mxu0 0.0
        %661 = vmatprep.subr.mxu0 0.0
        %662 = vmatpush1.xpose.msra.mxu0 0.0
        %663 = vmatprep.subr.mxu0 0.0
        %664 = vmatpush1.xpose.msra.mxu0 0.0
        %665 = vmatprep.subr.mxu0 0.0
        %666 = vmatpush1.xpose.msra.mxu0 0.0
        %667 = vmatprep.subr.mxu0 0.0
        %668 = vmatpush1.xpose.msra.mxu0 0.0
        %669 = vmatprep.subr.mxu0 0.0
        %670 = vmatpush1.xpose.msra.mxu0 0.0
        %671 = vmatprep.subr.mxu0 0.0
        %672 = vmatpush1.xpose.msra.mxu0 0.0
        %673 = vmatprep.subr.mxu0 0.0
        %674 = vmatpush1.xpose.msra.mxu0 0.0
        %675 = vmatprep.subr.mxu0 0.0
        %676 = vmatpush1.xpose.msra.mxu0 0.0
        %677 = vmatprep.subr.mxu0 0.0
        %678 = vmatpush1.xpose.msra.mxu0 0.0
        %679 = vmatprep.subr.mxu0 0.0
        %680 = vmatpush1.xpose.msra.mxu0 0.0
        %681 = vmatprep.mubr.f32.mxu0 0.0
        %682 = vmatmul.mubr.f32.gmra.mrb[0].mxu0 %v611
        %v683 = vpop.f32.mrb[0].mxu0
        %v684 = vadd.f32 %v598, %v683
        %v685 = vpop.f32.mrb[0].mxu0
        %686 = vmatprep.mubr.f32.mxu0 0.0
        %687 = vmatmul.mubr.f32.gmra.mrb[0].mxu0 %v611
        %v688 = vpop.f32.mrb[0].mxu0
        %v689 = vadd.f32 %v603, %v688
        %v690 = vpop.f32.mrb[0].mxu0
        %691 = vdwg.mxu0
        %vm692 = vcmp.gt.f32.partialorder %v684, 0.0
        %vm693 = vcmp.gt.f32.partialorder %v689, 0.0
        %v694 = vmul.f32 %v684, 0.2
        %v695 = vmul.f32 %v689, 0.2
        %v696 = vsel %vm692, %v684, %v694
        %v697 = vsel %vm693, %v689, %v695
        %v698 = vadd.f32 %v696, %v509
        %v699 = vadd.f32 %v697, %v510
        %v700 = vsel %vm513, %v698, -inf
        %701 = vmax.xlane.f32.xlu0 %v700
        %v702 = vpop.xlane.xlu0 %701
        %v703 = vsel %vm513, %v699, -inf
        %704 = vmax.xlane.f32.xlu0 %v703
        %v705 = vpop.xlane.xlu0 %704
        %v706 = vsub.f32 %v698, %v702
        %v707 = vsub.f32 %v699, %v705
        %v708 = vmul.f32 %v706, 1.442695
        %v709 = vpow.pop %v708
        %v710 = vmul.f32 %v707, 1.442695
        %v711 = vpow.pop %v710
        %v712 = vsel %vm513, %v709, 0.0
        %713 = vadd.xlane.f32.xlu0 %v712
        %v714 = vpop.xlane.xlu0 %713
        %v715 = vsel %vm513, %v711, 0.0
        %716 = vadd.xlane.f32.xlu0 %v715
        %v717 = vpop.xlane.xlu0 %716
        %v718 = vrcp.pop %v714
        %v719 = vrcp.pop %v717
        %v720 = vmul.f32 %v709, %v718
        %v721 = vmul.f32 %v711, %v719
        %v723 = vsel %vm513, %v720, 0
        %v726 = vsel %vm513, %v721, 0
        %728 = vmatprep.subr.mxu0 0.0
        %729 = vmatpush1.msra.mxu0 %v587
        %730 = vmatprep.subr.mxu0 0.0
        %731 = vmatpush1.msra.mxu0 %v592
        %732 = vmatprep.subr.mxu0 0.0
        %733 = vmatpush1.msra.mxu0 0.0
        %734 = vmatprep.subr.mxu0 0.0
        %735 = vmatpush1.msra.mxu0 0.0
        %736 = vmatprep.subr.mxu0 0.0
        %737 = vmatpush1.msra.mxu0 0.0
        %738 = vmatprep.subr.mxu0 0.0
        %739 = vmatpush1.msra.mxu0 0.0
        %740 = vmatprep.subr.mxu0 0.0
        %741 = vmatpush1.msra.mxu0 0.0
        %742 = vmatprep.subr.mxu0 0.0
        %743 = vmatpush1.msra.mxu0 0.0
        %744 = vmatprep.subr.mxu0 0.0
        %745 = vmatpush1.msra.mxu0 0.0
        %746 = vmatprep.subr.mxu0 0.0
        %747 = vmatpush1.msra.mxu0 0.0
        %748 = vmatprep.subr.mxu0 0.0
        %749 = vmatpush1.msra.mxu0 0.0
        %750 = vmatprep.subr.mxu0 0.0
        %751 = vmatpush1.msra.mxu0 0.0
        %752 = vmatprep.subr.mxu0 0.0
        %753 = vmatpush1.msra.mxu0 0.0
        %754 = vmatprep.subr.mxu0 0.0
        %755 = vmatpush1.msra.mxu0 0.0
        %756 = vmatprep.subr.mxu0 0.0
        %757 = vmatpush1.msra.mxu0 0.0
        %758 = vmatprep.subr.mxu0 0.0
        %759 = vmatpush1.msra.mxu0 0.0
        %760 = vmatprep.subr.mxu0 0.0
        %761 = vmatpush1.msra.mxu0 0.0
        %762 = vmatprep.subr.mxu0 0.0
        %763 = vmatpush1.msra.mxu0 0.0
        %764 = vmatprep.subr.mxu0 0.0
        %765 = vmatpush1.msra.mxu0 0.0
        %766 = vmatprep.subr.mxu0 0.0
        %767 = vmatpush1.msra.mxu0 0.0
        %768 = vmatprep.subr.mxu0 0.0
        %769 = vmatpush1.msra.mxu0 0.0
        %770 = vmatprep.subr.mxu0 0.0
        %771 = vmatpush1.msra.mxu0 0.0
        %772 = vmatprep.subr.mxu0 0.0
        %773 = vmatpush1.msra.mxu0 0.0
        %774 = vmatprep.subr.mxu0 0.0
        %775 = vmatpush1.msra.mxu0 0.0
        %776 = vmatprep.subr.mxu0 0.0
        %777 = vmatpush1.msra.mxu0 0.0
        %778 = vmatprep.subr.mxu0 0.0
        %779 = vmatpush1.msra.mxu0 0.0
        %780 = vmatprep.subr.mxu0 0.0
        %781 = vmatpush1.msra.mxu0 0.0
        %782 = vmatprep.subr.mxu0 0.0
        %783 = vmatpush1.msra.mxu0 0.0
        %784 = vmatprep.subr.mxu0 0.0
        %785 = vmatpush1.msra.mxu0 0.0
        %786 = vmatprep.subr.mxu0 0.0
        %787 = vmatpush1.msra.mxu0 0.0
        %788 = vmatprep.subr.mxu0 0.0
        %789 = vmatpush1.msra.mxu0 0.0
        %790 = vmatprep.subr.mxu0 0.0
        %791 = vmatpush1.msra.mxu0 0.0
        %792 = vmatprep.mubr.f32.mxu0 0.0
        %793 = vmatmul.mubr.f32.gmra.mrb[0].mxu0 %v723
        %v794 = vpop.f32.mrb[0].mxu0
        %v795 = vadd.f32 0.0, %v794
        %v796 = vpop.f32.mrb[0].mxu0
        %797 = vmatprep.mubr.f32.mxu0 0.0
        %798 = vmatmul.mubr.f32.gmra.mrb[0].mxu0 %v726
        %v799 = vpop.f32.mrb[0].mxu0
        %v800 = vadd.f32 0.0, %v799
        %v801 = vpop.f32.mrb[0].mxu0
        %802 = vdwg.mxu0
        %803 = vset.pattern.permute.xlu0 17
        %804 = vperm.xlu0 %803, %v587
        %v805 = vpop.permute.xlu0 %804
        %807 = vset.pattern.permute.xlu0 17
        %808 = vperm.xlu0 %807, %v592
        %v809 = vpop.permute.xlu0 %808
        %811 = vrot.lane.b32.xlu0 %v587, 109
        %v812 = vpop.permute.xlu0 %811
        %813 = vrot.lane.b32.xlu0 %v592, 109
        %v814 = vpop.permute.xlu0 %813
        %v815 = vsel %vm609, %v812, 0
        %v817 = vsel %vm609, %v814, 0
        %819 = vmatprep.subr.mxu0 0.0
        %820 = vmatpush1.xpose.msra.mxu0 %v815
        %821 = vmatprep.subr.mxu0 0.0
        %822 = vmatpush1.xpose.msra.mxu0 %v817
        %823 = vmatprep.subr.mxu0 0.0
        %824 = vmatpush1.xpose.msra.mxu0 0.0
        %825 = vmatprep.subr.mxu0 0.0
        %826 = vmatpush1.xpose.msra.mxu0 0.0
        %827 = vmatprep.subr.mxu0 0.0
        %828 = vmatpush1.xpose.msra.mxu0 0.0
        %829 = vmatprep.subr.mxu0 0.0
        %830 = vmatpush1.xpose.msra.mxu0 0.0
        %831 = vmatprep.subr.mxu0 0.0
        %832 = vmatpush1.xpose.msra.mxu0 0.0
        %833 = vmatprep.subr.mxu0 0.0
        %834 = vmatpush1.xpose.msra.mxu0 0.0
        %835 = vmatprep.subr.mxu0 0.0
        %836 = vmatpush1.xpose.msra.mxu0 0.0
        %837 = vmatprep.subr.mxu0 0.0
        %838 = vmatpush1.xpose.msra.mxu0 0.0
        %839 = vmatprep.subr.mxu0 0.0
        %840 = vmatpush1.xpose.msra.mxu0 0.0
        %841 = vmatprep.subr.mxu0 0.0
        %842 = vmatpush1.xpose.msra.mxu0 0.0
        %843 = vmatprep.subr.mxu0 0.0
        %844 = vmatpush1.xpose.msra.mxu0 0.0
        %845 = vmatprep.subr.mxu0 0.0
        %846 = vmatpush1.xpose.msra.mxu0 0.0
        %847 = vmatprep.subr.mxu0 0.0
        %848 = vmatpush1.xpose.msra.mxu0 0.0
        %849 = vmatprep.subr.mxu0 0.0
        %850 = vmatpush1.xpose.msra.mxu0 0.0
        %851 = vmatprep.subr.mxu0 0.0
        %852 = vmatpush1.xpose.msra.mxu0 0.0
        %853 = vmatprep.subr.mxu0 0.0
        %854 = vmatpush1.xpose.msra.mxu0 0.0
        %855 = vmatprep.subr.mxu0 0.0
        %856 = vmatpush1.xpose.msra.mxu0 0.0
        %857 = vmatprep.subr.mxu0 0.0
        %858 = vmatpush1.xpose.msra.mxu0 0.0
        %859 = vmatprep.subr.mxu0 0.0
        %860 = vmatpush1.xpose.msra.mxu0 0.0
        %861 = vmatprep.subr.mxu0 0.0
        %862 = vmatpush1.xpose.msra.mxu0 0.0
        %863 = vmatprep.subr.mxu0 0.0
        %864 = vmatpush1.xpose.msra.mxu0 0.0
        %865 = vmatprep.subr.mxu0 0.0
        %866 = vmatpush1.xpose.msra.mxu0 0.0
        %867 = vmatprep.subr.mxu0 0.0
        %868 = vmatpush1.xpose.msra.mxu0 0.0
        %869 = vmatprep.subr.mxu0 0.0
        %870 = vmatpush1.xpose.msra.mxu0 0.0
        %871 = vmatprep.subr.mxu0 0.0
        %872 = vmatpush1.xpose.msra.mxu0 0.0
        %873 = vmatprep.subr.mxu0 0.0
        %874 = vmatpush1.xpose.msra.mxu0 0.0
        %875 = vmatprep.subr.mxu0 0.0
        %876 = vmatpush1.xpose.msra.mxu0 0.0
        %877 = vmatprep.subr.mxu0 0.0
        %878 = vmatpush1.xpose.msra.mxu0 0.0
        %879 = vmatprep.subr.mxu0 0.0
        %880 = vmatpush1.xpose.msra.mxu0 0.0
        %881 = vmatprep.subr.mxu0 0.0
        %882 = vmatpush1.xpose.msra.mxu0 0.0
        %883 = vmatprep.mubr.f32.mxu0 0.0
        %884 = vmatmul.mubr.f32.gmra.mrb[0].mxu0 %v611
        %v885 = vpop.f32.mrb[0].mxu0
        %v886 = vadd.f32 %v805, %v885
        %v887 = vpop.f32.mrb[0].mxu0
        %888 = vmatprep.mubr.f32.mxu0 0.0
        %889 = vmatmul.mubr.f32.gmra.mrb[0].mxu0 %v611
        %v890 = vpop.f32.mrb[0].mxu0
        %v891 = vadd.f32 %v809, %v890
        %v892 = vpop.f32.mrb[0].mxu0
        %893 = vdwg.mxu0
        %vm894 = vcmp.gt.f32.partialorder %v886, 0.0
        %vm895 = vcmp.gt.f32.partialorder %v891, 0.0
        %v896 = vmul.f32 %v886, 0.2
        %v897 = vmul.f32 %v891, 0.2
        %v898 = vsel %vm894, %v886, %v896
        %v899 = vsel %vm895, %v891, %v897
        %v900 = vadd.f32 %v898, %v509
        %v901 = vadd.f32 %v899, %v510
        %v902 = vsel %vm513, %v900, -inf
        %903 = vmax.xlane.f32.xlu0 %v902
        %v904 = vpop.xlane.xlu0 %903
        %v905 = vsel %vm513, %v901, -inf
        %906 = vmax.xlane.f32.xlu0 %v905
        %v907 = vpop.xlane.xlu0 %906
        %v908 = vsub.f32 %v900, %v904
        %v909 = vsub.f32 %v901, %v907
        %v910 = vmul.f32 %v908, 1.442695
        %v911 = vpow.pop %v910
        %v912 = vmul.f32 %v909, 1.442695
        %v913 = vpow.pop %v912
        %v914 = vsel %vm513, %v911, 0.0
        %915 = vadd.xlane.f32.xlu0 %v914
        %v916 = vpop.xlane.xlu0 %915
        %v917 = vsel %vm513, %v913, 0.0
        %918 = vadd.xlane.f32.xlu0 %v917
        %v919 = vpop.xlane.xlu0 %918
        %v920 = vrcp.pop %v916
        %v921 = vrcp.pop %v919
        %v922 = vmul.f32 %v911, %v920
        %v923 = vmul.f32 %v913, %v921
        %924 = vrot.lane.b32.xlu0 %v587, 120
        %v925 = vpop.permute.xlu0 %924
        %926 = vrot.lane.b32.xlu0 %v592, 120
        %v927 = vpop.permute.xlu0 %926
        %v931 = vsel %vm513, %v922, 0
        %v934 = vsel %vm513, %v923, 0
        %936 = vmatprep.subr.mxu0 0.0
        %937 = vmatpush1.msra.mxu0 %v925
        %938 = vmatprep.subr.mxu0 0.0
        %939 = vmatpush1.msra.mxu0 %v927
        %940 = vmatprep.subr.mxu0 0.0
        %941 = vmatpush1.msra.mxu0 0.0
        %942 = vmatprep.subr.mxu0 0.0
        %943 = vmatpush1.msra.mxu0 0.0
        %944 = vmatprep.subr.mxu0 0.0
        %945 = vmatpush1.msra.mxu0 0.0
        %946 = vmatprep.subr.mxu0 0.0
        %947 = vmatpush1.msra.mxu0 0.0
        %948 = vmatprep.subr.mxu0 0.0
        %949 = vmatpush1.msra.mxu0 0.0
        %950 = vmatprep.subr.mxu0 0.0
        %951 = vmatpush1.msra.mxu0 0.0
        %952 = vmatprep.subr.mxu0 0.0
        %953 = vmatpush1.msra.mxu0 0.0
        %954 = vmatprep.subr.mxu0 0.0
        %955 = vmatpush1.msra.mxu0 0.0
        %956 = vmatprep.subr.mxu0 0.0
        %957 = vmatpush1.msra.mxu0 0.0
        %958 = vmatprep.subr.mxu0 0.0
        %959 = vmatpush1.msra.mxu0 0.0
        %960 = vmatprep.subr.mxu0 0.0
        %961 = vmatpush1.msra.mxu0 0.0
        %962 = vmatprep.subr.mxu0 0.0
        %963 = vmatpush1.msra.mxu0 0.0
        %964 = vmatprep.subr.mxu0 0.0
        %965 = vmatpush1.msra.mxu0 0.0
        %966 = vmatprep.subr.mxu0 0.0
        %967 = vmatpush1.msra.mxu0 0.0
        %968 = vmatprep.subr.mxu0 0.0
        %969 = vmatpush1.msra.mxu0 0.0
        %970 = vmatprep.subr.mxu0 0.0
        %971 = vmatpush1.msra.mxu0 0.0
        %972 = vmatprep.subr.mxu0 0.0
        %973 = vmatpush1.msra.mxu0 0.0
        %974 = vmatprep.subr.mxu0 0.0
        %975 = vmatpush1.msra.mxu0 0.0
        %976 = vmatprep.subr.mxu0 0.0
        %977 = vmatpush1.msra.mxu0 0.0
        %978 = vmatprep.subr.mxu0 0.0
        %979 = vmatpush1.msra.mxu0 0.0
        %980 = vmatprep.subr.mxu0 0.0
        %981 = vmatpush1.msra.mxu0 0.0
        %982 = vmatprep.subr.mxu0 0.0
        %983 = vmatpush1.msra.mxu0 0.0
        %984 = vmatprep.subr.mxu0 0.0
        %985 = vmatpush1.msra.mxu0 0.0
        %986 = vmatprep.subr.mxu0 0.0
        %987 = vmatpush1.msra.mxu0 0.0
        %988 = vmatprep.subr.mxu0 0.0
        %989 = vmatpush1.msra.mxu0 0.0
        %990 = vmatprep.subr.mxu0 0.0
        %991 = vmatpush1.msra.mxu0 0.0
        %992 = vmatprep.subr.mxu0 0.0
        %993 = vmatpush1.msra.mxu0 0.0
        %994 = vmatprep.subr.mxu0 0.0
        %995 = vmatpush1.msra.mxu0 0.0
        %996 = vmatprep.subr.mxu0 0.0
        %997 = vmatpush1.msra.mxu0 0.0
        %998 = vmatprep.subr.mxu0 0.0
        %999 = vmatpush1.msra.mxu0 0.0
        %1000 = vmatprep.mubr.f32.mxu0 0.0
        %1001 = vmatmul.mubr.f32.gmra.mrb[0].mxu0 %v931
        %v1002 = vpop.f32.mrb[0].mxu0
        %v1003 = vadd.f32 0.0, %v1002
        %v1004 = vpop.f32.mrb[0].mxu0
        %1005 = vmatprep.mubr.f32.mxu0 0.0
        %1006 = vmatmul.mubr.f32.gmra.mrb[0].mxu0 %v934
        %v1007 = vpop.f32.mrb[0].mxu0
        %v1008 = vadd.f32 0.0, %v1007
        %v1009 = vpop.f32.mrb[0].mxu0
        %1010 = vdwg.mxu0
        %1013 = vrot.lane.b32.xlu0 %v1003, 8
        %v1014 = vpop.permute.xlu0 %1013
        %1015 = vrot.lane.b32.xlu0 %v1008, 8
        %v1016 = vpop.permute.xlu0 %1015
        %vm1019 = vcmask 64512
        %v1020 = vsel %vm1019, %v795, %v1014
        %v1021 = vsel %vm1019, %v800, %v1016
        %v1022 = vld [vmem:[%s3] sm:$0x1]
        %v1024 = vlaneseq
        %v1025 = vshrl.u32 %v1024, 7
        %v1026 = vsub.s32 0, %v1025
        %v1027 = vrot.slane %v1022, %v1026
        %v1029 = vadd.f32 %v1020, %v1027
        %v1030 = vadd.f32 %v1021, %v1027
        %vm1031 = vcmp.gt.f32.partialorder %v1029, 0.0
        %vm1032 = vcmp.gt.f32.partialorder %v1030, 0.0
        %v1033 = vmin.f32 %v1029, 0.0
        %v1034 = vmin.f32 %v1030, 0.0
        %v1035 = vmul.f32 %v1033, 1.442695
        %v1036 = vpow.pop %v1035
        %v1037 = vmul.f32 %v1034, 1.442695
        %v1038 = vpow.pop %v1037
        %v1039 = vsub.f32 %v1036, 1.0
        %v1040 = vsub.f32 %v1038, 1.0
        %v1041 = vsel %vm1031, %v1029, %v1039
        %v1042 = vsel %vm1032, %v1030, %v1040
        %v1043 = vld [vmem:[%s4] sm:$0xff]
        %v1044 = vld [vmem:[%s4 + $0x8] sm:$0xff]
        %v1046 = vsel %vm513, %v1041, 0
        %v1049 = vsel %vm513, %v1042, 0
        %1051 = vmatprep.subr.mxu0 0.0
        %1052 = vmatpush1.msra.mxu0 %v1043
        %1053 = vmatprep.subr.mxu0 0.0
        %1054 = vmatpush1.msra.mxu0 %v1044
        %1055 = vmatprep.subr.mxu0 0.0
        %1056 = vmatpush1.msra.mxu0 0.0
        %1057 = vmatprep.subr.mxu0 0.0
        %1058 = vmatpush1.msra.mxu0 0.0
        %1059 = vmatprep.subr.mxu0 0.0
        %1060 = vmatpush1.msra.mxu0 0.0
        %1061 = vmatprep.subr.mxu0 0.0
        %1062 = vmatpush1.msra.mxu0 0.0
        %1063 = vmatprep.subr.mxu0 0.0
        %1064 = vmatpush1.msra.mxu0 0.0
        %1065 = vmatprep.subr.mxu0 0.0
        %1066 = vmatpush1.msra.mxu0 0.0
        %1067 = vmatprep.subr.mxu0 0.0
        %1068 = vmatpush1.msra.mxu0 0.0
        %1069 = vmatprep.subr.mxu0 0.0
        %1070 = vmatpush1.msra.mxu0 0.0
        %1071 = vmatprep.subr.mxu0 0.0
        %1072 = vmatpush1.msra.mxu0 0.0
        %1073 = vmatprep.subr.mxu0 0.0
        %1074 = vmatpush1.msra.mxu0 0.0
        %1075 = vmatprep.subr.mxu0 0.0
        %1076 = vmatpush1.msra.mxu0 0.0
        %1077 = vmatprep.subr.mxu0 0.0
        %1078 = vmatpush1.msra.mxu0 0.0
        %1079 = vmatprep.subr.mxu0 0.0
        %1080 = vmatpush1.msra.mxu0 0.0
        %1081 = vmatprep.subr.mxu0 0.0
        %1082 = vmatpush1.msra.mxu0 0.0
        %1083 = vmatprep.subr.mxu0 0.0
        %1084 = vmatpush1.msra.mxu0 0.0
        %1085 = vmatprep.subr.mxu0 0.0
        %1086 = vmatpush1.msra.mxu0 0.0
        %1087 = vmatprep.subr.mxu0 0.0
        %1088 = vmatpush1.msra.mxu0 0.0
        %1089 = vmatprep.subr.mxu0 0.0
        %1090 = vmatpush1.msra.mxu0 0.0
        %1091 = vmatprep.subr.mxu0 0.0
        %1092 = vmatpush1.msra.mxu0 0.0
        %1093 = vmatprep.subr.mxu0 0.0
        %1094 = vmatpush1.msra.mxu0 0.0
        %1095 = vmatprep.subr.mxu0 0.0
        %1096 = vmatpush1.msra.mxu0 0.0
        %1097 = vmatprep.subr.mxu0 0.0
        %1098 = vmatpush1.msra.mxu0 0.0
        %1099 = vmatprep.subr.mxu0 0.0
        %1100 = vmatpush1.msra.mxu0 0.0
        %1101 = vmatprep.subr.mxu0 0.0
        %1102 = vmatpush1.msra.mxu0 0.0
        %1103 = vmatprep.subr.mxu0 0.0
        %1104 = vmatpush1.msra.mxu0 0.0
        %1105 = vmatprep.subr.mxu0 0.0
        %1106 = vmatpush1.msra.mxu0 0.0
        %1107 = vmatprep.subr.mxu0 0.0
        %1108 = vmatpush1.msra.mxu0 0.0
        %1109 = vmatprep.subr.mxu0 0.0
        %1110 = vmatpush1.msra.mxu0 0.0
        %1111 = vmatprep.subr.mxu0 0.0
        %1112 = vmatpush1.msra.mxu0 0.0
        %1113 = vmatprep.subr.mxu0 0.0
        %1114 = vmatpush1.msra.mxu0 0.0
        %1115 = vmatprep.mubr.f32.mxu0 0.0
        %1116 = vmatmul.mubr.f32.gmra.mrb[0].mxu0 %v1046
        %v1117 = vpop.f32.mrb[0].mxu0
        %v1118 = vadd.f32 0.0, %v1117
        %v1119 = vpop.f32.mrb[0].mxu0
        %1120 = vmatprep.mubr.f32.mxu0 0.0
        %1121 = vmatmul.mubr.f32.gmra.mrb[0].mxu0 %v1049
        %v1122 = vpop.f32.mrb[0].mxu0
        %v1123 = vadd.f32 0.0, %v1122
        %v1124 = vpop.f32.mrb[0].mxu0
        %1125 = vdwg.mxu0
        %1127 = vset.pattern.permute.xlu0 16
        %1128 = vperm.xlu0 %1127, %v1118
        %v1129 = vpop.permute.xlu0 %1128
        %1132 = vset.pattern.permute.xlu0 16
        %1133 = vperm.xlu0 %1132, %v1123
        %v1134 = vpop.permute.xlu0 %1133
        %1136 = vrot.lane.b32.xlu0 %v1118, 111
        %v1137 = vpop.permute.xlu0 %1136
        %1138 = vrot.lane.b32.xlu0 %v1123, 111
        %v1139 = vpop.permute.xlu0 %1138
        %v1140 = vsel %vm609, %v1137, 0
        %v1142 = vsel %vm609, %v1139, 0
        %1144 = vmatprep.subr.mxu0 0.0
        %1145 = vmatpush1.xpose.msra.mxu0 %v1140
        %1146 = vmatprep.subr.mxu0 0.0
        %1147 = vmatpush1.xpose.msra.mxu0 %v1142
        %1148 = vmatprep.subr.mxu0 0.0
        %1149 = vmatpush1.xpose.msra.mxu0 0.0
        %1150 = vmatprep.subr.mxu0 0.0
        %1151 = vmatpush1.xpose.msra.mxu0 0.0
        %1152 = vmatprep.subr.mxu0 0.0
        %1153 = vmatpush1.xpose.msra.mxu0 0.0
        %1154 = vmatprep.subr.mxu0 0.0
        %1155 = vmatpush1.xpose.msra.mxu0 0.0
        %1156 = vmatprep.subr.mxu0 0.0
        %1157 = vmatpush1.xpose.msra.mxu0 0.0
        %1158 = vmatprep.subr.mxu0 0.0
        %1159 = vmatpush1.xpose.msra.mxu0 0.0
        %1160 = vmatprep.subr.mxu0 0.0
        %1161 = vmatpush1.xpose.msra.mxu0 0.0
        %1162 = vmatprep.subr.mxu0 0.0
        %1163 = vmatpush1.xpose.msra.mxu0 0.0
        %1164 = vmatprep.subr.mxu0 0.0
        %1165 = vmatpush1.xpose.msra.mxu0 0.0
        %1166 = vmatprep.subr.mxu0 0.0
        %1167 = vmatpush1.xpose.msra.mxu0 0.0
        %1168 = vmatprep.subr.mxu0 0.0
        %1169 = vmatpush1.xpose.msra.mxu0 0.0
        %1170 = vmatprep.subr.mxu0 0.0
        %1171 = vmatpush1.xpose.msra.mxu0 0.0
        %1172 = vmatprep.subr.mxu0 0.0
        %1173 = vmatpush1.xpose.msra.mxu0 0.0
        %1174 = vmatprep.subr.mxu0 0.0
        %1175 = vmatpush1.xpose.msra.mxu0 0.0
        %1176 = vmatprep.subr.mxu0 0.0
        %1177 = vmatpush1.xpose.msra.mxu0 0.0
        %1178 = vmatprep.subr.mxu0 0.0
        %1179 = vmatpush1.xpose.msra.mxu0 0.0
        %1180 = vmatprep.subr.mxu0 0.0
        %1181 = vmatpush1.xpose.msra.mxu0 0.0
        %1182 = vmatprep.subr.mxu0 0.0
        %1183 = vmatpush1.xpose.msra.mxu0 0.0
        %1184 = vmatprep.subr.mxu0 0.0
        %1185 = vmatpush1.xpose.msra.mxu0 0.0
        %1186 = vmatprep.subr.mxu0 0.0
        %1187 = vmatpush1.xpose.msra.mxu0 0.0
        %1188 = vmatprep.subr.mxu0 0.0
        %1189 = vmatpush1.xpose.msra.mxu0 0.0
        %1190 = vmatprep.subr.mxu0 0.0
        %1191 = vmatpush1.xpose.msra.mxu0 0.0
        %1192 = vmatprep.subr.mxu0 0.0
        %1193 = vmatpush1.xpose.msra.mxu0 0.0
        %1194 = vmatprep.subr.mxu0 0.0
        %1195 = vmatpush1.xpose.msra.mxu0 0.0
        %1196 = vmatprep.subr.mxu0 0.0
        %1197 = vmatpush1.xpose.msra.mxu0 0.0
        %1198 = vmatprep.subr.mxu0 0.0
        %1199 = vmatpush1.xpose.msra.mxu0 0.0
        %1200 = vmatprep.subr.mxu0 0.0
        %1201 = vmatpush1.xpose.msra.mxu0 0.0
        %1202 = vmatprep.subr.mxu0 0.0
        %1203 = vmatpush1.xpose.msra.mxu0 0.0
        %1204 = vmatprep.subr.mxu0 0.0
        %1205 = vmatpush1.xpose.msra.mxu0 0.0
        %1206 = vmatprep.subr.mxu0 0.0
        %1207 = vmatpush1.xpose.msra.mxu0 0.0
        %1208 = vmatprep.mubr.f32.mxu0 0.0
        %1209 = vmatmul.mubr.f32.gmra.mrb[0].mxu0 %v611
        %v1210 = vpop.f32.mrb[0].mxu0
        %v1211 = vadd.f32 %v1129, %v1210
        %v1212 = vpop.f32.mrb[0].mxu0
        %1213 = vmatprep.mubr.f32.mxu0 0.0
        %1214 = vmatmul.mubr.f32.gmra.mrb[0].mxu0 %v611
        %v1215 = vpop.f32.mrb[0].mxu0
        %v1216 = vadd.f32 %v1134, %v1215
        %v1217 = vpop.f32.mrb[0].mxu0
        %1218 = vdwg.mxu0
        %vm1219 = vcmp.gt.f32.partialorder %v1211, 0.0
        %vm1220 = vcmp.gt.f32.partialorder %v1216, 0.0
        %v1221 = vmul.f32 %v1211, 0.2
        %v1222 = vmul.f32 %v1216, 0.2
        %v1223 = vsel %vm1219, %v1211, %v1221
        %v1224 = vsel %vm1220, %v1216, %v1222
        %v1225 = vadd.f32 %v1223, %v509
        %v1226 = vadd.f32 %v1224, %v510
        %v1227 = vsel %vm513, %v1225, -inf
        %1228 = vmax.xlane.f32.xlu0 %v1227
        %v1229 = vpop.xlane.xlu0 %1228
        %v1230 = vsel %vm513, %v1226, -inf
        %1231 = vmax.xlane.f32.xlu0 %v1230
        %v1232 = vpop.xlane.xlu0 %1231
        %v1233 = vsub.f32 %v1225, %v1229
        %v1234 = vsub.f32 %v1226, %v1232
        %v1235 = vmul.f32 %v1233, 1.442695
        %v1236 = vpow.pop %v1235
        %v1237 = vmul.f32 %v1234, 1.442695
        %v1238 = vpow.pop %v1237
        %v1239 = vsel %vm513, %v1236, 0.0
        %1240 = vadd.xlane.f32.xlu0 %v1239
        %v1241 = vpop.xlane.xlu0 %1240
        %v1242 = vsel %vm513, %v1238, 0.0
        %1243 = vadd.xlane.f32.xlu0 %v1242
        %v1244 = vpop.xlane.xlu0 %1243
        %v1245 = vrcp.pop %v1241
        %v1246 = vrcp.pop %v1244
        %v1247 = vmul.f32 %v1236, %v1245
        %v1248 = vmul.f32 %v1238, %v1246
        %v1249 = vld [vmem:[%s5] sm:$0x1]
        %v1251 = vlaneseq
        %v1252 = vshrl.u32 %v1251, 7
        %v1253 = vsub.s32 0, %v1252
        %v1254 = vrot.slane %v1249, %v1253
        %v1257 = vsel %vm513, %v1247, 0
        %v1260 = vsel %vm513, %v1248, 0
        %1262 = vmatprep.subr.mxu0 0.0
        %1263 = vmatpush1.msra.mxu0 %v1118
        %1264 = vmatprep.subr.mxu0 0.0
        %1265 = vmatpush1.msra.mxu0 %v1123
        %1266 = vmatprep.subr.mxu0 0.0
        %1267 = vmatpush1.msra.mxu0 0.0
        %1268 = vmatprep.subr.mxu0 0.0
        %1269 = vmatpush1.msra.mxu0 0.0
        %1270 = vmatprep.subr.mxu0 0.0
        %1271 = vmatpush1.msra.mxu0 0.0
        %1272 = vmatprep.subr.mxu0 0.0
        %1273 = vmatpush1.msra.mxu0 0.0
        %1274 = vmatprep.subr.mxu0 0.0
        %1275 = vmatpush1.msra.mxu0 0.0
        %1276 = vmatprep.subr.mxu0 0.0
        %1277 = vmatpush1.msra.mxu0 0.0
        %1278 = vmatprep.subr.mxu0 0.0
        %1279 = vmatpush1.msra.mxu0 0.0
        %1280 = vmatprep.subr.mxu0 0.0
        %1281 = vmatpush1.msra.mxu0 0.0
        %1282 = vmatprep.subr.mxu0 0.0
        %1283 = vmatpush1.msra.mxu0 0.0
        %1284 = vmatprep.subr.mxu0 0.0
        %1285 = vmatpush1.msra.mxu0 0.0
        %1286 = vmatprep.subr.mxu0 0.0
        %1287 = vmatpush1.msra.mxu0 0.0
        %1288 = vmatprep.subr.mxu0 0.0
        %1289 = vmatpush1.msra.mxu0 0.0
        %1290 = vmatprep.subr.mxu0 0.0
        %1291 = vmatpush1.msra.mxu0 0.0
        %1292 = vmatprep.subr.mxu0 0.0
        %1293 = vmatpush1.msra.mxu0 0.0
        %1294 = vmatprep.subr.mxu0 0.0
        %1295 = vmatpush1.msra.mxu0 0.0
        %1296 = vmatprep.subr.mxu0 0.0
        %1297 = vmatpush1.msra.mxu0 0.0
        %1298 = vmatprep.subr.mxu0 0.0
        %1299 = vmatpush1.msra.mxu0 0.0
        %1300 = vmatprep.subr.mxu0 0.0
        %1301 = vmatpush1.msra.mxu0 0.0
        %1302 = vmatprep.subr.mxu0 0.0
        %1303 = vmatpush1.msra.mxu0 0.0
        %1304 = vmatprep.subr.mxu0 0.0
        %1305 = vmatpush1.msra.mxu0 0.0
        %1306 = vmatprep.subr.mxu0 0.0
        %1307 = vmatpush1.msra.mxu0 0.0
        %1308 = vmatprep.subr.mxu0 0.0
        %1309 = vmatpush1.msra.mxu0 0.0
        %1310 = vmatprep.subr.mxu0 0.0
        %1311 = vmatpush1.msra.mxu0 0.0
        %1312 = vmatprep.subr.mxu0 0.0
        %1313 = vmatpush1.msra.mxu0 0.0
        %1314 = vmatprep.subr.mxu0 0.0
        %1315 = vmatpush1.msra.mxu0 0.0
        %1316 = vmatprep.subr.mxu0 0.0
        %1317 = vmatpush1.msra.mxu0 0.0
        %1318 = vmatprep.subr.mxu0 0.0
        %1319 = vmatpush1.msra.mxu0 0.0
        %1320 = vmatprep.subr.mxu0 0.0
        %1321 = vmatpush1.msra.mxu0 0.0
        %1322 = vmatprep.subr.mxu0 0.0
        %1323 = vmatpush1.msra.mxu0 0.0
        %1324 = vmatprep.subr.mxu0 0.0
        %1325 = vmatpush1.msra.mxu0 0.0
        %1326 = vmatprep.mubr.f32.mxu0 0.0
        %1327 = vmatmul.mubr.f32.gmra.mrb[0].mxu0 %v1257
        %v1328 = vpop.f32.mrb[0].mxu0
        %v1329 = vadd.f32 %v1254, %v1328
        %v1330 = vpop.f32.mrb[0].mxu0
        %1331 = vmatprep.mubr.f32.mxu0 0.0
        %1332 = vmatmul.mubr.f32.gmra.mrb[0].mxu0 %v1260
        %v1333 = vpop.f32.mrb[0].mxu0
        %v1334 = vadd.f32 %v1254, %v1333
        %v1335 = vpop.f32.mrb[0].mxu0
        %1336 = vdwg.mxu0
        %v1338 = vrot.slane %v1329, 1
        %1339 = vrot.lane.b32.xlu0 %v1338, 16
        %v1340 = vpop.permute.xlu0 %1339
        %v1342 = vrot.slane %v1329, 2
        %1343 = vrot.lane.b32.xlu0 %v1342, 32
        %v1344 = vpop.permute.xlu0 %1343
        %v1346 = vrot.slane %v1329, 3
        %1347 = vrot.lane.b32.xlu0 %v1346, 48
        %v1348 = vpop.permute.xlu0 %1347
        %v1350 = vrot.slane %v1329, 4
        %1351 = vrot.lane.b32.xlu0 %v1350, 64
        %v1352 = vpop.permute.xlu0 %1351
        %v1354 = vrot.slane %v1329, 5
        %1355 = vrot.lane.b32.xlu0 %v1354, 80
        %v1356 = vpop.permute.xlu0 %1355
        %v1358 = vrot.slane %v1329, 6
        %1359 = vrot.lane.b32.xlu0 %v1358, 96
        %v1360 = vpop.permute.xlu0 %1359
        %v1362 = vrot.slane %v1329, 7
        %1363 = vrot.lane.b32.xlu0 %v1362, 112
        %v1364 = vpop.permute.xlu0 %1363
        %v1367 = vrot.slane %v1334, 1
        %1368 = vrot.lane.b32.xlu0 %v1367, 16
        %v1369 = vpop.permute.xlu0 %1368
        %v1371 = vrot.slane %v1334, 2
        %1372 = vrot.lane.b32.xlu0 %v1371, 32
        %v1373 = vpop.permute.xlu0 %1372
        %v1375 = vrot.slane %v1334, 3
        %1376 = vrot.lane.b32.xlu0 %v1375, 48
        %v1377 = vpop.permute.xlu0 %1376
        %v1379 = vrot.slane %v1334, 4
        %1380 = vrot.lane.b32.xlu0 %v1379, 64
        %v1381 = vpop.permute.xlu0 %1380
        %v1383 = vrot.slane %v1334, 5
        %1384 = vrot.lane.b32.xlu0 %v1383, 80
        %v1385 = vpop.permute.xlu0 %1384
        %v1387 = vrot.slane %v1334, 6
        %1388 = vrot.lane.b32.xlu0 %v1387, 96
        %v1389 = vpop.permute.xlu0 %1388
        %v1391 = vrot.slane %v1334, 7
        %1392 = vrot.lane.b32.xlu0 %v1391, 112
        %v1393 = vpop.permute.xlu0 %1392
        %v1395 = vsel %vm513, %v1329, %v1340
        %vm1396 = vcmask 261120
        %v1397 = vsel %vm1396, %v1395, %v1344
        %vm1398 = vcmask 392192
        %v1399 = vsel %vm1398, %v1397, %v1348
        %vm1400 = vcmask 523264
        %v1401 = vsel %vm1400, %v1399, %v1352
        %vm1402 = vcmask 654336
        %v1403 = vsel %vm1402, %v1401, %v1356
        %vm1404 = vcmask 785408
        %v1405 = vsel %vm1404, %v1403, %v1360
        %vm1406 = vcmask 916480
        %v1407 = vsel %vm1406, %v1405, %v1364
        %v1408 = vsel %vm513, %v1334, %v1369
        %v1409 = vsel %vm1396, %v1408, %v1373
        %v1410 = vsel %vm1398, %v1409, %v1377
        %v1411 = vsel %vm1400, %v1410, %v1381
        %v1412 = vsel %vm1402, %v1411, %v1385
        %v1413 = vsel %vm1404, %v1412, %v1389
        %v1414 = vsel %vm1406, %v1413, %v1393
        %v1415 = vld [vmem:[%s6] sm:$0xff]
        %v1416 = vld [vmem:[%s6 + $0x8] sm:$0xff]
        %v1417 = vld [vmem:[%s6 + $0x10] sm:$0xff]
        %v1418 = vld [vmem:[%s6 + $0x18] sm:$0xff]
        %v1419 = vld [vmem:[%s6 + $0x20] sm:$0xff]
        %v1420 = vld [vmem:[%s6 + $0x28] sm:$0xff]
        %v1421 = vld [vmem:[%s6 + $0x30] sm:$0xff]
        %v1422 = vld [vmem:[%s6 + $0x38] sm:$0xff]
        %v1423 = vld [vmem:[%s6 + $0x40] sm:$0xff]
        %v1424 = vld [vmem:[%s6 + $0x48] sm:$0xff]
        %v1425 = vld [vmem:[%s6 + $0x50] sm:$0xff]
        %v1426 = vld [vmem:[%s6 + $0x58] sm:$0xff]
        %v1427 = vld [vmem:[%s6 + $0x60] sm:$0xff]
        %v1428 = vld [vmem:[%s6 + $0x68] sm:$0xff]
        %v1429 = vld [vmem:[%s6 + $0x70] sm:$0xff]
        %v1430 = vld [vmem:[%s6 + $0x78] sm:$0xff]
        %v1431 = vld [vmem:[%s6 + $0x80] sm:$0xff]
        %v1432 = vld [vmem:[%s6 + $0x88] sm:$0xff]
        %v1433 = vld [vmem:[%s6 + $0x90] sm:$0xff]
        %v1434 = vld [vmem:[%s6 + $0x98] sm:$0xff]
        %v1435 = vld [vmem:[%s6 + $0xa0] sm:$0xff]
        %v1436 = vld [vmem:[%s6 + $0xa8] sm:$0xff]
        %v1437 = vld [vmem:[%s6 + $0xb0] sm:$0xff]
        %v1438 = vld [vmem:[%s6 + $0xb8] sm:$0xff]
        %v1439 = vld [vmem:[%s6 + $0xc0] sm:$0xff]
        %v1440 = vld [vmem:[%s6 + $0xc8] sm:$0xff]
        %v1441 = vld [vmem:[%s6 + $0xd0] sm:$0xff]
        %v1442 = vld [vmem:[%s6 + $0xd8] sm:$0xff]
        %v1443 = vld [vmem:[%s6 + $0xe0] sm:$0xff]
        %v1444 = vld [vmem:[%s6 + $0xe8] sm:$0xff]
        %v1445 = vld [vmem:[%s6 + $0xf0] sm:$0xff]
        %v1446 = vld [vmem:[%s6 + $0xf8] sm:$0xff]
        %v1447 = vld [vmem:[%s7] sm:$0x1]
        %1448 = vmatprep.subr.mxu0 0.0
        %1449 = vmatpush1.msra.mxu0 %v1415
        %1450 = vmatprep.subr.mxu0 0.0
        %1451 = vmatpush1.msra.mxu0 %v1416
        %1452 = vmatprep.subr.mxu0 0.0
        %1453 = vmatpush1.msra.mxu0 %v1417
        %1454 = vmatprep.subr.mxu0 0.0
        %1455 = vmatpush1.msra.mxu0 %v1418
        %1456 = vmatprep.subr.mxu0 0.0
        %1457 = vmatpush1.msra.mxu0 %v1419
        %1458 = vmatprep.subr.mxu0 0.0
        %1459 = vmatpush1.msra.mxu0 %v1420
        %1460 = vmatprep.subr.mxu0 0.0
        %1461 = vmatpush1.msra.mxu0 %v1421
        %1462 = vmatprep.subr.mxu0 0.0
        %1463 = vmatpush1.msra.mxu0 %v1422
        %1464 = vmatprep.subr.mxu0 0.0
        %1465 = vmatpush1.msra.mxu0 %v1423
        %1466 = vmatprep.subr.mxu0 0.0
        %1467 = vmatpush1.msra.mxu0 %v1424
        %1468 = vmatprep.subr.mxu0 0.0
        %1469 = vmatpush1.msra.mxu0 %v1425
        %1470 = vmatprep.subr.mxu0 0.0
        %1471 = vmatpush1.msra.mxu0 %v1426
        %1472 = vmatprep.subr.mxu0 0.0
        %1473 = vmatpush1.msra.mxu0 %v1427
        %1474 = vmatprep.subr.mxu0 0.0
        %1475 = vmatpush1.msra.mxu0 %v1428
        %1476 = vmatprep.subr.mxu0 0.0
        %1477 = vmatpush1.msra.mxu0 %v1429
        %1478 = vmatprep.subr.mxu0 0.0
        %1479 = vmatpush1.msra.mxu0 %v1430
        %1480 = vmatprep.subr.mxu0 0.0
        %1481 = vmatpush1.msra.mxu0 %v1431
        %1482 = vmatprep.subr.mxu0 0.0
        %1483 = vmatpush1.msra.mxu0 %v1432
        %1484 = vmatprep.subr.mxu0 0.0
        %1485 = vmatpush1.msra.mxu0 %v1433
        %1486 = vmatprep.subr.mxu0 0.0
        %1487 = vmatpush1.msra.mxu0 %v1434
        %1488 = vmatprep.subr.mxu0 0.0
        %1489 = vmatpush1.msra.mxu0 %v1435
        %1490 = vmatprep.subr.mxu0 0.0
        %1491 = vmatpush1.msra.mxu0 %v1436
        %1492 = vmatprep.subr.mxu0 0.0
        %1493 = vmatpush1.msra.mxu0 %v1437
        %1494 = vmatprep.subr.mxu0 0.0
        %1495 = vmatpush1.msra.mxu0 %v1438
        %1496 = vmatprep.subr.mxu0 0.0
        %1497 = vmatpush1.msra.mxu0 %v1439
        %1498 = vmatprep.subr.mxu0 0.0
        %1499 = vmatpush1.msra.mxu0 %v1440
        %1500 = vmatprep.subr.mxu0 0.0
        %1501 = vmatpush1.msra.mxu0 %v1441
        %1502 = vmatprep.subr.mxu0 0.0
        %1503 = vmatpush1.msra.mxu0 %v1442
        %1504 = vmatprep.subr.mxu0 0.0
        %1505 = vmatpush1.msra.mxu0 %v1443
        %1506 = vmatprep.subr.mxu0 0.0
        %1507 = vmatpush1.msra.mxu0 %v1444
        %1508 = vmatprep.subr.mxu0 0.0
        %1509 = vmatpush1.msra.mxu0 %v1445
        %1510 = vmatprep.subr.mxu0 0.0
        %1511 = vmatpush1.msra.mxu0 %v1446
        %1512 = vmatprep.mubr.f32.mxu0 %v1414
        %1513 = vmatmul.mubr.f32.gmra.mrb[0].mxu0 %v1407
        %v1514 = vpop.f32.mrb[0].mxu0
        %v1515 = vadd.f32 %v1447, %v1514
        %v1516 = vpop.f32.mrb[0].mxu0
        %1517 = vdwg.mxu0
        %vm1518 = vcmp.gt.f32.partialorder %v1515, 0.0
        %v1519 = vmin.f32 %v1515, 0.0
        %v1520 = vmul.f32 %v1519, 1.442695
        %v1521 = vpow.pop %v1520
        %v1522 = vsub.f32 %v1521, 1.0
        %v1523 = vsel %vm1518, %v1515, %v1522
        %vm1524 = vcmask 122880
        %1525 = vst.msk [vmem:[%s491] sm:$0x1] %vm1524, %v1523
        %v1526 = vld [vmem:[%s8] sm:$0xff]
        %v1527 = vld [vmem:[%s8 + $0x8] sm:$0xff]
        %v1528 = vld [vmem:[%s9] sm:$0x1]
        %v1530 = vsel %vm513, %v1523, 0
        %1532 = vmatprep.subr.mxu0 0.0
        %1533 = vmatpush1.msra.mxu0 %v1526
        %1534 = vmatprep.subr.mxu0 0.0
        %1535 = vmatpush1.msra.mxu0 %v1527
        %1536 = vmatprep.subr.mxu0 0.0
        %1537 = vmatpush1.msra.mxu0 0.0
        %1538 = vmatprep.subr.mxu0 0.0
        %1539 = vmatpush1.msra.mxu0 0.0
        %1540 = vmatprep.subr.mxu0 0.0
        %1541 = vmatpush1.msra.mxu0 0.0
        %1542 = vmatprep.subr.mxu0 0.0
        %1543 = vmatpush1.msra.mxu0 0.0
        %1544 = vmatprep.subr.mxu0 0.0
        %1545 = vmatpush1.msra.mxu0 0.0
        %1546 = vmatprep.subr.mxu0 0.0
        %1547 = vmatpush1.msra.mxu0 0.0
        %1548 = vmatprep.subr.mxu0 0.0
        %1549 = vmatpush1.msra.mxu0 0.0
        %1550 = vmatprep.subr.mxu0 0.0
        %1551 = vmatpush1.msra.mxu0 0.0
        %1552 = vmatprep.subr.mxu0 0.0
        %1553 = vmatpush1.msra.mxu0 0.0
        %1554 = vmatprep.subr.mxu0 0.0
        %1555 = vmatpush1.msra.mxu0 0.0
        %1556 = vmatprep.subr.mxu0 0.0
        %1557 = vmatpush1.msra.mxu0 0.0
        %1558 = vmatprep.subr.mxu0 0.0
        %1559 = vmatpush1.msra.mxu0 0.0
        %1560 = vmatprep.subr.mxu0 0.0
        %1561 = vmatpush1.msra.mxu0 0.0
        %1562 = vmatprep.subr.mxu0 0.0
        %1563 = vmatpush1.msra.mxu0 0.0
        %1564 = vmatprep.subr.mxu0 0.0
        %1565 = vmatpush1.msra.mxu0 0.0
        %1566 = vmatprep.subr.mxu0 0.0
        %1567 = vmatpush1.msra.mxu0 0.0
        %1568 = vmatprep.subr.mxu0 0.0
        %1569 = vmatpush1.msra.mxu0 0.0
        %1570 = vmatprep.subr.mxu0 0.0
        %1571 = vmatpush1.msra.mxu0 0.0
        %1572 = vmatprep.subr.mxu0 0.0
        %1573 = vmatpush1.msra.mxu0 0.0
        %1574 = vmatprep.subr.mxu0 0.0
        %1575 = vmatpush1.msra.mxu0 0.0
        %1576 = vmatprep.subr.mxu0 0.0
        %1577 = vmatpush1.msra.mxu0 0.0
        %1578 = vmatprep.subr.mxu0 0.0
        %1579 = vmatpush1.msra.mxu0 0.0
        %1580 = vmatprep.subr.mxu0 0.0
        %1581 = vmatpush1.msra.mxu0 0.0
        %1582 = vmatprep.subr.mxu0 0.0
        %1583 = vmatpush1.msra.mxu0 0.0
        %1584 = vmatprep.subr.mxu0 0.0
        %1585 = vmatpush1.msra.mxu0 0.0
        %1586 = vmatprep.subr.mxu0 0.0
        %1587 = vmatpush1.msra.mxu0 0.0
        %1588 = vmatprep.subr.mxu0 0.0
        %1589 = vmatpush1.msra.mxu0 0.0
        %1590 = vmatprep.subr.mxu0 0.0
        %1591 = vmatpush1.msra.mxu0 0.0
        %1592 = vmatprep.subr.mxu0 0.0
        %1593 = vmatpush1.msra.mxu0 0.0
        %1594 = vmatprep.subr.mxu0 0.0
        %1595 = vmatpush1.msra.mxu0 0.0
        %1596 = vmatprep.mubr.f32.mxu0 0.0
        %1597 = vmatmul.mubr.f32.gmra.mrb[0].mxu0 %v1530
        %v1598 = vpop.f32.mrb[0].mxu0
        %v1599 = vadd.f32 %v1528, %v1598
        %v1600 = vpop.f32.mrb[0].mxu0
        %1601 = vdwg.mxu0
        %1603 = vrot.lane.b32.xlu0 %v1599, 64
        %v1604 = vpop.permute.xlu0 %1603
        %vm1606 = vcmask 8192
        %1607 = vst.msk [vmem:[%s479] sm:$0x1] %vm1606, %v1604
        %v1608 = vmax.f32 %v1599, 0.0
        %v1609 = vld [vmem:[%s10] sm:$0xff]
        %v1610 = vld [vmem:[%s10 + $0x8] sm:$0xff]
        %v1611 = vld [vmem:[%s10 + $0x10] sm:$0xff]
        %v1612 = vld [vmem:[%s10 + $0x18] sm:$0xff]
        %v1613 = vld [vmem:[%s10 + $0x20] sm:$0xff]
        %v1614 = vld [vmem:[%s10 + $0x28] sm:$0xff]
        %v1615 = vld [vmem:[%s10 + $0x30] sm:$0xff]
        %v1616 = vld [vmem:[%s10 + $0x38] sm:$0xff]
        %v1617 = vld [vmem:[%s11] sm:$0x1]
        %v1619 = vsel %vm1400, %v1608, 0
        %1621 = vmatprep.subr.mxu0 0.0
        %1622 = vmatpush1.msra.mxu0 %v1609
        %1623 = vmatprep.subr.mxu0 0.0
        %1624 = vmatpush1.msra.mxu0 %v1610
        %1625 = vmatprep.subr.mxu0 0.0
        %1626 = vmatpush1.msra.mxu0 %v1611
        %1627 = vmatprep.subr.mxu0 0.0
        %1628 = vmatpush1.msra.mxu0 %v1612
        %1629 = vmatprep.subr.mxu0 0.0
        %1630 = vmatpush1.msra.mxu0 %v1613
        %1631 = vmatprep.subr.mxu0 0.0
        %1632 = vmatpush1.msra.mxu0 %v1614
        %1633 = vmatprep.subr.mxu0 0.0
        %1634 = vmatpush1.msra.mxu0 %v1615
        %1635 = vmatprep.subr.mxu0 0.0
        %1636 = vmatpush1.msra.mxu0 %v1616
        %1637 = vmatprep.subr.mxu0 0.0
        %1638 = vmatpush1.msra.mxu0 0.0
        %1639 = vmatprep.subr.mxu0 0.0
        %1640 = vmatpush1.msra.mxu0 0.0
        %1641 = vmatprep.subr.mxu0 0.0
        %1642 = vmatpush1.msra.mxu0 0.0
        %1643 = vmatprep.subr.mxu0 0.0
        %1644 = vmatpush1.msra.mxu0 0.0
        %1645 = vmatprep.subr.mxu0 0.0
        %1646 = vmatpush1.msra.mxu0 0.0
        %1647 = vmatprep.subr.mxu0 0.0
        %1648 = vmatpush1.msra.mxu0 0.0
        %1649 = vmatprep.subr.mxu0 0.0
        %1650 = vmatpush1.msra.mxu0 0.0
        %1651 = vmatprep.subr.mxu0 0.0
        %1652 = vmatpush1.msra.mxu0 0.0
        %1653 = vmatprep.subr.mxu0 0.0
        %1654 = vmatpush1.msra.mxu0 0.0
        %1655 = vmatprep.subr.mxu0 0.0
        %1656 = vmatpush1.msra.mxu0 0.0
        %1657 = vmatprep.subr.mxu0 0.0
        %1658 = vmatpush1.msra.mxu0 0.0
        %1659 = vmatprep.subr.mxu0 0.0
        %1660 = vmatpush1.msra.mxu0 0.0
        %1661 = vmatprep.subr.mxu0 0.0
        %1662 = vmatpush1.msra.mxu0 0.0
        %1663 = vmatprep.subr.mxu0 0.0
        %1664 = vmatpush1.msra.mxu0 0.0
        %1665 = vmatprep.subr.mxu0 0.0
        %1666 = vmatpush1.msra.mxu0 0.0
        %1667 = vmatprep.subr.mxu0 0.0
        %1668 = vmatpush1.msra.mxu0 0.0
        %1669 = vmatprep.subr.mxu0 0.0
        %1670 = vmatpush1.msra.mxu0 0.0
        %1671 = vmatprep.subr.mxu0 0.0
        %1672 = vmatpush1.msra.mxu0 0.0
        %1673 = vmatprep.subr.mxu0 0.0
        %1674 = vmatpush1.msra.mxu0 0.0
        %1675 = vmatprep.subr.mxu0 0.0
        %1676 = vmatpush1.msra.mxu0 0.0
        %1677 = vmatprep.subr.mxu0 0.0
        %1678 = vmatpush1.msra.mxu0 0.0
        %1679 = vmatprep.subr.mxu0 0.0
        %1680 = vmatpush1.msra.mxu0 0.0
        %1681 = vmatprep.subr.mxu0 0.0
        %1682 = vmatpush1.msra.mxu0 0.0
        %1683 = vmatprep.subr.mxu0 0.0
        %1684 = vmatpush1.msra.mxu0 0.0
        %1685 = vmatprep.mubr.f32.mxu0 0.0
        %1686 = vmatmul.mubr.f32.gmra.mrb[0].mxu0 %v1619
        %v1687 = vpop.f32.mrb[0].mxu0
        %v1688 = vadd.f32 %v1617, %v1687
        %v1689 = vpop.f32.mrb[0].mxu0
        %1690 = vdwg.mxu0
        %vm1691 = vcmask 40960
        %1692 = vst.msk [vmem:[%s485] sm:$0x1] %vm1691, %v1688
        %s1693 = sand.u32 %s302, 1
        %s1694 = scalar_lea.sflag [#allocation3], %s1693
        %s1695 = sand.u32 %s302, 1
        %s1696 = scalar_lea.vmem [#allocation2], %s1695
        %s1697 = sand.u32 %s32, 1
        %s1698 = scalar_lea.sflag [#allocation5], %s1697
        %s1699 = sand.u32 %s328, 1
        %s1700 = scalar_lea.vmem [#allocation4], %s1699
        %s1701 = sand.u32 %s32, 1
        %s1702 = scalar_lea.sflag [#allocation5], %s1701
        %s1703 = sand.u32 %s354, 1
        %s1704 = scalar_lea.vmem [#allocation6], %s1703
        // Predicated region
        $region69: #{gatr_forward.1} parent=67 // pred_check
          %p1705 = pneg %p312
        $region70: #{gatr_forward.1} parent=67 // pred_check_branch
          %1707 = sbr.rel (%p1705) target = $region72
        $region71: #{gatr_forward.1} parent=67 // pred_region
          %s1709 = ssub.s32 16, 16
          %1710 = vsyncadd %s1694, %s1709
          %s1711 = smul.addr %s32, 16
          %s1712 = scalar_lea.hbm %s12, %s1711
          %s1714 = sshll.u32 %s1696, 4
          %s1715 = int_to_ptr.vmem [resolvable:$true] %s1714
          %1717 = dma.vmem_to_hbm [thread:$0]  %s1715, 16, %s1712, %s1694
        $region72: #{gatr_forward.1} parent=67 // pred_fallthru
          _
        // Predicated region
        $region73: #{gatr_forward.1} parent=67 // pred_check
          %p1718 = pneg %p338
        $region74: #{gatr_forward.1} parent=67 // pred_check_branch
          %1720 = sbr.rel (%p1718) target = $region76
        $region75: #{gatr_forward.1} parent=67 // pred_region
          %s1722 = ssub.s32 16, 16
          %1723 = vsyncadd %s1698, %s1722
          %s1724 = smul.addr %s32, 16
          %s1725 = scalar_lea.hbm %s13, %s1724
          %s1727 = sshll.u32 %s1700, 4
          %s1728 = int_to_ptr.vmem [resolvable:$true] %s1727
          %1730 = dma.vmem_to_hbm [thread:$0]  %s1728, 16, %s1725, %s1698
        $region76: #{gatr_forward.1} parent=67 // pred_fallthru
          _
        // Predicated region
        $region77: #{gatr_forward.1} parent=67 // pred_check
          %p1731 = pneg %p364
        $region78: #{gatr_forward.1} parent=67 // pred_check_branch
          %1733 = sbr.rel (%p1731) target = $region80
        $region79: #{gatr_forward.1} parent=67 // pred_region
          %s1735 = ssub.s32 16, 16
          %1736 = vsyncadd %s1702, %s1735
          %s1737 = smul.addr %s32, 16
          %s1738 = scalar_lea.hbm %s14, %s1737
          %s1740 = sshll.u32 %s1704, 4
          %s1741 = int_to_ptr.vmem [resolvable:$true] %s1740
          %1743 = dma.vmem_to_hbm [thread:$0]  %s1741, 16, %s1738, %s1702
        $region80: #{gatr_forward.1} parent=67 // pred_fallthru
          _
      $region68: #{gatr_forward.1} parent=5 // pred_fallthru
        _
      %p1744 = scmp.le.s32.totalorder 2, %s27
      // Predicated region
      $region81: #{gatr_forward.1} parent=5 // pred_check
        %p1745 = pneg %p1744
      $region82: #{gatr_forward.1} parent=5 // pred_check_branch
        %1747 = sbr.rel (%p1745) target = $region84
      $region83: #{gatr_forward.1} parent=5 // pred_region
        %s1748 = ssub.s32 %s27, 2
        // Predicated region
        $region85: #{gatr_forward.1} parent=83 // pred_check
          %p1749 = pneg %p318
        $region86: #{gatr_forward.1} parent=83 // pred_check_branch
          %1751 = sbr.rel (%p1749) target = $region88
        $region87: #{gatr_forward.1} parent=83 // pred_region
          %s1752 = sand.u32 %s303, 1
          %s1753 = scalar_lea.sflag [#allocation3], %s1752
          %s1754 = sand.u32 %s303, 1
          %s1755 = scalar_lea.vmem [#allocation2], %s1754
          %1756 = dma.done %s1753, 16
        $region88: #{gatr_forward.1} parent=83 // pred_fallthru
          _
        // Predicated region
        $region89: #{gatr_forward.1} parent=83 // pred_check
          %p1757 = pneg %p344
        $region90: #{gatr_forward.1} parent=83 // pred_check_branch
          %1759 = sbr.rel (%p1757) target = $region92
        $region91: #{gatr_forward.1} parent=83 // pred_region
          %s1760 = sand.u32 %s33, 1
          %s1761 = scalar_lea.sflag [#allocation5], %s1760
          %s1762 = sand.u32 %s329, 1
          %s1763 = scalar_lea.vmem [#allocation4], %s1762
          %1764 = dma.done %s1761, 16
        $region92: #{gatr_forward.1} parent=83 // pred_fallthru
          _
        // Predicated region
        $region93: #{gatr_forward.1} parent=83 // pred_check
          %p1765 = pneg %p370
        $region94: #{gatr_forward.1} parent=83 // pred_check_branch
          %1767 = sbr.rel (%p1765) target = $region96
        $region95: #{gatr_forward.1} parent=83 // pred_region
          %s1768 = sand.u32 %s33, 1
          %s1769 = scalar_lea.sflag [#allocation5], %s1768
          %s1770 = sand.u32 %s355, 1
          %s1771 = scalar_lea.vmem [#allocation6], %s1770
          %1772 = dma.done %s1769, 16
        $region96: #{gatr_forward.1} parent=83 // pred_fallthru
          _
      $region84: #{gatr_forward.1} parent=5 // pred_fallthru
        _
    $region6: #{gatr_forward.1} parent=1 // loop_footer
      %s31 = sadd.s32 1, %s27
    $region7: #{gatr_forward.1} parent=1 // loop_footer_branch
      %26 = sbr.rel target = $region3
    $region8: #{gatr_forward.1} parent=1 // loop_exit
      _
    %1773 = vsyncpa [#allocation3], 1
    %s1774 = scalar_lea.sflag [#allocation3], 1
    %1775 = vsyncpa %s1774, 1
    %1776 = vsyncpa [#allocation5], 1
    %s1777 = scalar_lea.sflag [#allocation5], 1
    %1778 = vsyncpa %s1777, 1

</llo_original>
